<compile_context>
chip_gen: v7x
topology: tpu7x:2x2x1
jax: 0.10.0
libtpu: 0.0.40
codegen_flags: <defaults>
</compile_context>

<pallas_src>
import numpy as np
import jax
import jax.numpy as jnp
from jax.experimental import pallas as pl
from jax.experimental.pallas import tpu as pltpu


# --------------------------------------------------------------------------
# Host-side weight folding: upsample(x2, nearest) + pad(1) folded into weights
# --------------------------------------------------------------------------
def _fold_weights(weight_oihw):
    """Return wfold (9*Cin, 4*Cout) such that

        patch(Hin*Win, 9*Cin) @ wfold  ==  conv output for all 4 parities,

    where patch is the standard 3x3 im2col of the zero-padded ORIGINAL image
    (offsets (dy, dx) in {0,1,2}^2, channel fastest) and output column
    (a*2 + b)*Cout + d corresponds to out[2i+a, 2j+b, d].
    """
    Cout, Cin, _, _ = weight_oihw.shape
    w_hw = jnp.transpose(weight_oihw, (2, 3, 1, 0)).astype(jnp.float32)  # (ky,kx,Cin,Cout)

    # For output row 2i+a, conv tap ky reads padded-original row i + dy with
    # dy = floor((a + ky - 1)/2) + 1  (same along columns).  R[a, dy, ky] = 1.
    R = np.zeros((2, 3, 3), np.float32)
    for a in range(2):
        for ky in range(3):
            dy = (a + ky - 1) // 2 + 1
            R[a, dy, ky] = 1.0
    R = jnp.asarray(R)

    # weff[dy, dx, c, a, b, d] = sum_{ky,kx} R[a,dy,ky] R[b,dx,kx] w_hw[ky,kx,c,d]
    weff = jnp.einsum('ayk,bxl,klcd->yxcabd', R, R, w_hw)
    return weff.reshape(9 * Cin, 4 * Cout)


# --------------------------------------------------------------------------
# Kernel 1: per-image fused (upsample+pad+conv3x3) + per-image BN partial stats
# --------------------------------------------------------------------------
def _conv_stats_kernel(x_ref, wf_ref, y_ref, stats_ref, xpo_ref):
    # x_ref    : (1, Hin, Win, Cin)      original (NOT upsampled) image
    # wf_ref   : (9*Cin, 4*Cout)         folded weights
    # y_ref    : (1, Hin*Win, 4*Cout)    conv output, all 4 parities per pixel
    # stats_ref: (1, 2, 4*Cout)          per-image [sum; sum of squares]
    # xpo_ref  : VMEM scratch (Hin+2, Win+2, Cin)  zero-padded original image
    _, Hin, Win, Cin = x_ref.shape

    # Build the zero-padded original image entirely in VMEM.
    xpo_ref[...] = jnp.zeros_like(xpo_ref)
    xpo_ref[1:Hin + 1, 1:Win + 1, :] = x_ref[0]

    # im2col of the ORIGINAL image: (Hin*Win, 9*Cin), column order (dy, dx, c).
    cols = []
    for dy in range(3):
        for dx in range(3):
            cols.append(
                xpo_ref[dy:dy + Hin, dx:dx + Win, :].reshape(Hin * Win, Cin))
    patch = jnp.concatenate(cols, axis=-1)

    # One MXU matmul producing all four output parities at once.
    acc = jnp.dot(patch, wf_ref[...], preferred_element_type=jnp.float32)

    y_ref[0] = acc.astype(y_ref.dtype)

    # Per-image partial BN statistics (reduced across images/parities in glue).
    s = jnp.sum(acc, axis=0, keepdims=True)
    sq = jnp.sum(acc * acc, axis=0, keepdims=True)
    stats_ref[0] = jnp.concatenate([s, sq], axis=0)


# --------------------------------------------------------------------------
# Kernel 2: BatchNorm (folded to scale/bias) + ReLU, lane-dense & in-place
# --------------------------------------------------------------------------
def _bn_relu_kernel(y_ref, scale_ref, bias_ref, o_ref):
    # y_ref/o_ref: (tile_rows, Win*4*Cout); scale/bias: (1, Win*4*Cout)
    y = y_ref[...]
    o_ref[...] = jnp.maximum(y * scale_ref[...] + bias_ref[...], 0.0).astype(o_ref.dtype)


def _pick_row_tile(rows, max_rows=1024):
    """Largest row tile <= max_rows that divides `rows` (multiple of 8 if tiled)."""
    if rows <= max_rows:
        return rows
    for t in range(max_rows, 7, -1):
        if rows % t == 0 and t % 8 == 0:
            return t
    return rows


# --------------------------------------------------------------------------
# Wrapper
# --------------------------------------------------------------------------
def up_forward(x_nchw, weight_oihw, gamma, beta, *, scale_factor=2, eps=1e-5):
    """Pallas implementation of up_.forward. x_nchw: (N, Cin, Hin, Win) -> NCHW out."""
    if scale_factor != 2:
        # TODO(synk): parity folding is derived for the module default (x2 nearest).
        raise NotImplementedError("only scale_factor=2 is implemented")

    N, Cin, Hin, Win = x_nchw.shape
    Cout = weight_oihw.shape[0]
    H, W = 2 * Hin, 2 * Win
    K4 = 4 * Cout

    # Small entry-layout change on the ORIGINAL (4x smaller than upsampled) image.
    x = jnp.transpose(x_nchw, (0, 2, 3, 1)).astype(jnp.float32)      # (N,Hin,Win,Cin)
    wfold = _fold_weights(weight_oihw)                                # (9*Cin, 4*Cout)

    # --- kernel 1: fused upsample+pad+conv + per-image stats (batch parallel) ---
    y, stats = pl.pallas_call(
        _conv_stats_kernel,
        out_shape=(jax.ShapeDtypeStruct((N, Hin * Win, K4), jnp.float32),
                   jax.ShapeDtypeStruct((N, 2, K4), jnp.float32)),
        grid_spec=pltpu.PrefetchScalarGridSpec(
            num_scalar_prefetch=0,
            grid=(N,),
            in_specs=[
                pl.BlockSpec((1, Hin, Win, Cin), lambda n: (n, 0, 0, 0)),
                pl.BlockSpec((9 * Cin, K4), lambda n: (0, 0)),
            ],
            out_specs=(
                pl.BlockSpec((1, Hin * Win, K4), lambda n: (n, 0, 0)),
                pl.BlockSpec((1, 2, K4), lambda n: (n, 0, 0)),
            ),
            scratch_shapes=[pltpu.VMEM((Hin + 2, Win + 2, Cin), jnp.float32)],
        ),
        compiler_params=pltpu.CompilerParams(
            dimension_semantics=("parallel",),
            vmem_limit_bytes=32 * 1024 * 1024),
    )(x, wfold)

    # --- glue: fold batch statistics + affine into per-channel scale / bias ---
    tot = stats.reshape(N, 2, 4, Cout).sum(axis=(0, 2))               # (2, Cout)
    count = N * H * W
    mean = tot[0] / count
    var = tot[1] / count - mean * mean                                # biased var
    scale = gamma.astype(jnp.float32) * jax.lax.rsqrt(var + eps)
    bias = beta.astype(jnp.float32) - mean * scale

    # --- kernel 2: BN + ReLU on a lane-dense 2D view, in place over y ---
    WC = Win * K4                                                     # lane-dense width
    ROWS = N * Hin
    y2 = y.reshape(ROWS, WC)                                          # free reshape
    scale_row = jnp.tile(scale, Win * 4).reshape(1, WC)
    bias_row = jnp.tile(bias, Win * 4).reshape(1, WC)

    tile_r = _pick_row_tile(ROWS)
    out2 = pl.pallas_call(
        _bn_relu_kernel,
        out_shape=jax.ShapeDtypeStruct((ROWS, WC), jnp.float32),
        grid_spec=pltpu.PrefetchScalarGridSpec(
            num_scalar_prefetch=0,
            grid=(ROWS // tile_r,),
            in_specs=[
                pl.BlockSpec((tile_r, WC), lambda i: (i, 0)),
                pl.BlockSpec((1, WC), lambda i: (0, 0)),
                pl.BlockSpec((1, WC), lambda i: (0, 0)),
            ],
            out_specs=pl.BlockSpec((tile_r, WC), lambda i: (i, 0)),
        ),
        compiler_params=pltpu.CompilerParams(
            dimension_semantics=("parallel",),
            vmem_limit_bytes=32 * 1024 * 1024),
        input_output_aliases={0: 0},                                   # in-place
    )(y2, scale_row, bias_row)

    # --- single exit layout pass: de-interleave parities and go back to NCHW ---
    out = out2.reshape(N, Hin, Win, 2, 2, Cout)        # (n, i, j, a, b, d)
    out = jnp.transpose(out, (0, 5, 1, 3, 2, 4))       # (n, d, i, a, j, b)
    return out.reshape(N, Cout, H, W)                  # out[n, d, 2i+a, 2j+b]


# --------------------------------------------------------------------------
# Pure-JAX reference mirroring the PyTorch forward (training-mode BN)
# --------------------------------------------------------------------------
def _reference_forward(x_nchw, weight_oihw, gamma, beta, *, scale_factor=2, eps=1e-5):
    x = jnp.transpose(x_nchw, (0, 2, 3, 1)).astype(jnp.float32)
    x_up = jnp.repeat(jnp.repeat(x, scale_factor, axis=1), scale_factor, axis=2)
    N, H, W, Cin = x_up.shape
    xp = jnp.pad(x_up, ((0, 0), (1, 1), (1, 1), (0, 0)))
    w = jnp.transpose(weight_oihw, (2, 3, 1, 0)).astype(jnp.float32)
    Cout = w.shape[-1]
    y = jnp.zeros((N, H, W, Cout), jnp.float32)
    for ky in range(3):
        for kx in range(3):
            y = y + jnp.einsum('nhwc,cd->nhwd',
                               xp[:, ky:ky + H, kx:kx + W, :], w[ky, kx])
    mean = y.mean(axis=(0, 1, 2))
    var = y.var(axis=(0, 1, 2))
    yn = (y - mean) * jax.lax.rsqrt(var + eps) * gamma + beta
    out = jnp.maximum(yn, 0.0)
    return jnp.transpose(out, (0, 3, 1, 2))


if __name__ == "__main__":
    key = jax.random.PRNGKey(0)
    k_x, k_w = jax.random.split(key)

    N, in_ch, out_ch, Hin, Win = 2, 4, 8, 16, 16

    x = jax.random.normal(k_x, (N, in_ch, Hin, Win), dtype=jnp.float32)
    # Conv2d weight (out_ch, in_ch, 3, 3), deterministic init.
    weight = jax.random.normal(k_w, (out_ch, in_ch, 3, 3), dtype=jnp.float32) * 0.1
    # BatchNorm2d default init: gamma=1, beta=0.
    gamma = jnp.ones((out_ch,), dtype=jnp.float32)
    beta = jnp.zeros((out_ch,), dtype=jnp.float32)

    fwd = jax.jit(lambda a, b, c, d: up_forward(a, b, c, d, scale_factor=2))
    out = fwd(x, weight, gamma, beta)
    out = jax.block_until_ready(out)

    ref = _reference_forward(x, weight, gamma, beta, scale_factor=2)
    assert out.shape == (N, out_ch, 2 * Hin, 2 * Win), out.shape
    assert jnp.allclose(out, ref, atol=2e-4, rtol=2e-4), \
        float(jnp.max(jnp.abs(out - ref)))

    print("KERNEL_OK")
</pallas_src>

<mosaic_0001>
module attributes {stable_mosaic.version = 11 : i64} {
  func.func @_conv_stats_kernel(%arg0: i32, %arg1: memref<1x16x16x4xf32, #tpu.memory_space<vmem>>, %arg2: memref<36x32xf32, #tpu.memory_space<vmem>>, %arg3: memref<1x256x32xf32, #tpu.memory_space<vmem>>, %arg4: memref<1x2x32xf32, #tpu.memory_space<vmem>>, %arg5: memref<18x18x4xf32, #tpu.memory_space<vmem>>) attributes {dimension_semantics = [#tpu.dimension_semantics<parallel>], iteration_bounds = array<i64: 2>, scalar_prefetch = 0 : i64, scratch_operands = 1 : i64, tpu.core_type = #tpu.core_type<tc>, window_params = [{transform_indices = @transform_0, window_bounds = array<i64: 1, 16, 16, 4>}, {pipeline_mode = #tpu.pipeline_mode<synchronous>, transform_indices = @transform_1, window_bounds = array<i64: 36, 32>}, {transform_indices = @transform_2, window_bounds = array<i64: 1, 256, 32>}, {transform_indices = @transform_3, window_bounds = array<i64: 1, 2, 32>}]} {
    %cst = arith.constant 0.000000e+00 : f32
    %0 = vector.broadcast %cst : f32 to vector<18x18x4xf32>
    %c0 = arith.constant 0 : index
    %c0_0 = arith.constant 0 : index
    %c0_1 = arith.constant 0 : index
    %1 = vector.load %arg5[%c0, %c0_0, %c0_1] : memref<18x18x4xf32, #tpu.memory_space<vmem>>, vector<18x18x4xf32>
    tpu.vector_store %arg5[%c0, %c0_0, %c0_1], %0 {strides = array<i32>} : memref<18x18x4xf32, #tpu.memory_space<vmem>>, vector<18x18x4xf32>,
    %c0_2 = arith.constant 0 : index
    %c0_3 = arith.constant 0 : index
    %c0_4 = arith.constant 0 : index
    %c0_5 = arith.constant 0 : index
    %2 = vector.load %arg1[%c0_2, %c0_3, %c0_4, %c0_5] : memref<1x16x16x4xf32, #tpu.memory_space<vmem>>, vector<1x16x16x4xf32>
    %3 = vector.shape_cast %2 : vector<1x16x16x4xf32> to vector<16x16x4xf32>
    %c1 = arith.constant 1 : index
    %c1_6 = arith.constant 1 : index
    %c0_7 = arith.constant 0 : index
    %4 = vector.load %arg5[%c1, %c1_6, %c0_7] : memref<18x18x4xf32, #tpu.memory_space<vmem>>, vector<16x16x4xf32>
    tpu.vector_store %arg5[%c1, %c1_6, %c0_7], %3 {strides = array<i32>} : memref<18x18x4xf32, #tpu.memory_space<vmem>>, vector<16x16x4xf32>,
    %c0_8 = arith.constant 0 : index
    %c0_9 = arith.constant 0 : index
    %c0_10 = arith.constant 0 : index
    %5 = vector.load %arg5[%c0_8, %c0_9, %c0_10] : memref<18x18x4xf32, #tpu.memory_space<vmem>>, vector<16x16x4xf32>
    %6 = vector.shape_cast %5 : vector<16x16x4xf32> to vector<256x4xf32>
    %c0_11 = arith.constant 0 : index
    %c1_12 = arith.constant 1 : index
    %c0_13 = arith.constant 0 : index
    %7 = vector.load %arg5[%c0_11, %c1_12, %c0_13] : memref<18x18x4xf32, #tpu.memory_space<vmem>>, vector<16x16x4xf32>
    %8 = vector.shape_cast %7 : vector<16x16x4xf32> to vector<256x4xf32>
    %c0_14 = arith.constant 0 : index
    %c2 = arith.constant 2 : index
    %c0_15 = arith.constant 0 : index
    %9 = vector.load %arg5[%c0_14, %c2, %c0_15] : memref<18x18x4xf32, #tpu.memory_space<vmem>>, vector<16x16x4xf32>
    %10 = vector.shape_cast %9 : vector<16x16x4xf32> to vector<256x4xf32>
    %c1_16 = arith.constant 1 : index
    %c0_17 = arith.constant 0 : index
    %c0_18 = arith.constant 0 : index
    %11 = vector.load %arg5[%c1_16, %c0_17, %c0_18] : memref<18x18x4xf32, #tpu.memory_space<vmem>>, vector<16x16x4xf32>
    %12 = vector.shape_cast %11 : vector<16x16x4xf32> to vector<256x4xf32>
    %c1_19 = arith.constant 1 : index
    %c1_20 = arith.constant 1 : index
    %c0_21 = arith.constant 0 : index
    %13 = vector.load %arg5[%c1_19, %c1_20, %c0_21] : memref<18x18x4xf32, #tpu.memory_space<vmem>>, vector<16x16x4xf32>
    %14 = vector.shape_cast %13 : vector<16x16x4xf32> to vector<256x4xf32>
    %c1_22 = arith.constant 1 : index
    %c2_23 = arith.constant 2 : index
    %c0_24 = arith.constant 0 : index
    %15 = vector.load %arg5[%c1_22, %c2_23, %c0_24] : memref<18x18x4xf32, #tpu.memory_space<vmem>>, vector<16x16x4xf32>
    %16 = vector.shape_cast %15 : vector<16x16x4xf32> to vector<256x4xf32>
    %c2_25 = arith.constant 2 : index
    %c0_26 = arith.constant 0 : index
    %c0_27 = arith.constant 0 : index
    %17 = vector.load %arg5[%c2_25, %c0_26, %c0_27] : memref<18x18x4xf32, #tpu.memory_space<vmem>>, vector<16x16x4xf32>
    %18 = vector.shape_cast %17 : vector<16x16x4xf32> to vector<256x4xf32>
    %c2_28 = arith.constant 2 : index
    %c1_29 = arith.constant 1 : index
    %c0_30 = arith.constant 0 : index
    %19 = vector.load %arg5[%c2_28, %c1_29, %c0_30] : memref<18x18x4xf32, #tpu.memory_space<vmem>>, vector<16x16x4xf32>
    %20 = vector.shape_cast %19 : vector<16x16x4xf32> to vector<256x4xf32>
    %c2_31 = arith.constant 2 : index
    %c2_32 = arith.constant 2 : index
    %c0_33 = arith.constant 0 : index
    %21 = vector.load %arg5[%c2_31, %c2_32, %c0_33] : memref<18x18x4xf32, #tpu.memory_space<vmem>>, vector<16x16x4xf32>
    %22 = vector.shape_cast %21 : vector<16x16x4xf32> to vector<256x4xf32>
    %23 = tpu.concatenate %6, %8, %10, %12, %14, %16, %18, %20, %22 in 1 : vector<256x4xf32>, vector<256x4xf32>, vector<256x4xf32>, vector<256x4xf32>, vector<256x4xf32>, vector<256x4xf32>, vector<256x4xf32>, vector<256x4xf32>, vector<256x4xf32> -> vector<256x36xf32>
    %c0_34 = arith.constant 0 : index
    %c0_35 = arith.constant 0 : index
    %24 = vector.load %arg2[%c0_34, %c0_35] : memref<36x32xf32, #tpu.memory_space<vmem>>, vector<36x32xf32>
    %cst_36 = arith.constant dense<0.000000e+00> : vector<256x32xf32>
    %25 = tpu.matmul %23, %24, %cst_36 {dimension_numbers = #tpu.dot_dimension_numbers<[1], [0], [0], [1], [0, 0, 1, 1], [], []>} : vector<256x36xf32>, vector<36x32xf32>, vector<256x32xf32> -> vector<256x32xf32>
    %c0_37 = arith.constant 0 : index
    %c0_38 = arith.constant 0 : index
    %c0_39 = arith.constant 0 : index
    %26 = vector.load %arg3[%c0_37, %c0_38, %c0_39] : memref<1x256x32xf32, #tpu.memory_space<vmem>>, vector<1x256x32xf32>
    %27 = vector.shape_cast %26 : vector<1x256x32xf32> to vector<256x32xf32>
    %28 = vector.shape_cast %25 : vector<256x32xf32> to vector<1x256x32xf32>
    tpu.vector_store %arg3[%c0_37, %c0_38, %c0_39], %28 {strides = array<i32>} : memref<1x256x32xf32, #tpu.memory_space<vmem>>, vector<1x256x32xf32>,
    %cst_40 = arith.constant dense<0.000000e+00> : vector<32xf32>
    %29 = vector.multi_reduction <add>, %25, %cst_40 [0] : vector<256x32xf32> to vector<32xf32>
    %30 = vector.shape_cast %29 : vector<32xf32> to vector<1x32xf32>
    %31 = arith.mulf %25, %25 : vector<256x32xf32>
    %cst_41 = arith.constant dense<0.000000e+00> : vector<32xf32>
    %32 = vector.multi_reduction <add>, %31, %cst_41 [0] : vector<256x32xf32> to vector<32xf32>
    %33 = vector.shape_cast %32 : vector<32xf32> to vector<1x32xf32>
    %34 = tpu.concatenate %30, %33 in 0 : vector<1x32xf32>, vector<1x32xf32> -> vector<2x32xf32>
    %c0_42 = arith.constant 0 : index
    %c0_43 = arith.constant 0 : index
    %c0_44 = arith.constant 0 : index
    %35 = vector.load %arg4[%c0_42, %c0_43, %c0_44] : memref<1x2x32xf32, #tpu.memory_space<vmem>>, vector<1x2x32xf32>
    %36 = vector.shape_cast %35 : vector<1x2x32xf32> to vector<2x32xf32>
    %37 = vector.shape_cast %34 : vector<2x32xf32> to vector<1x2x32xf32>
    tpu.vector_store %arg4[%c0_42, %c0_43, %c0_44], %37 {strides = array<i32>} : memref<1x2x32xf32, #tpu.memory_space<vmem>>, vector<1x2x32xf32>,
    return
  }
  func.func @transform_0(%arg0: i32) -> (i32, i32, i32, i32) {
    %c0_i32 = arith.constant 0 : i32
    %c0_i32_0 = arith.constant 0 : i32
    %c0_i32_1 = arith.constant 0 : i32
    %c0_i32_2 = arith.constant 0 : i32
    return %arg0, %c0_i32, %c0_i32_0, %c0_i32_1 : i32, i32, i32, i32
  }
  func.func @transform_1(%arg0: i32) -> (i32, i32) {
    %c0_i32 = arith.constant 0 : i32
    %c0_i32_0 = arith.constant 0 : i32
    %c0_i32_1 = arith.constant 0 : i32
    return %c0_i32, %c0_i32_0 : i32, i32
  }
  func.func @transform_2(%arg0: i32) -> (i32, i32, i32) {
    %c0_i32 = arith.constant 0 : i32
    %c0_i32_0 = arith.constant 0 : i32
    %c0_i32_1 = arith.constant 0 : i32
    return %arg0, %c0_i32, %c0_i32_0 : i32, i32, i32
  }
  func.func @transform_3(%arg0: i32) -> (i32, i32, i32) {
    %c0_i32 = arith.constant 0 : i32
    %c0_i32_0 = arith.constant 0 : i32
    %c0_i32_1 = arith.constant 0 : i32
    return %arg0, %c0_i32, %c0_i32_0 : i32, i32, i32
  }
}

module attributes {stable_mosaic.version = 11 : i64} {
  func.func @_bn_relu_kernel(%arg0: i32, %arg1: memref<32x512xf32, #tpu.memory_space<vmem>>, %arg2: memref<1x512xf32, #tpu.memory_space<vmem>>, %arg3: memref<1x512xf32, #tpu.memory_space<vmem>>, %arg4: memref<32x512xf32, #tpu.memory_space<vmem>>) attributes {dimension_semantics = [#tpu.dimension_semantics<parallel>], iteration_bounds = array<i64: 1>, scalar_prefetch = 0 : i64, scratch_operands = 0 : i64, tpu.core_type = #tpu.core_type<tc>, window_params = [{transform_indices = @transform_0, window_bounds = array<i64: 32, 512>}, {pipeline_mode = #tpu.pipeline_mode<synchronous>, transform_indices = @transform_1, window_bounds = array<i64: 1, 512>}, {pipeline_mode = #tpu.pipeline_mode<synchronous>, transform_indices = @transform_2, window_bounds = array<i64: 1, 512>}, {transform_indices = @transform_3, window_bounds = array<i64: 32, 512>}]} {
    %c0 = arith.constant 0 : index
    %c0_0 = arith.constant 0 : index
    %0 = vector.load %arg1[%c0, %c0_0] : memref<32x512xf32, #tpu.memory_space<vmem>>, vector<32x512xf32>
    %c0_1 = arith.constant 0 : index
    %c0_2 = arith.constant 0 : index
    %1 = vector.load %arg2[%c0_1, %c0_2] : memref<1x512xf32, #tpu.memory_space<vmem>>, vector<1x512xf32>
    %2 = vector.broadcast %1 : vector<1x512xf32> to vector<32x512xf32>
    %3 = arith.mulf %0, %2 : vector<32x512xf32>
    %c0_3 = arith.constant 0 : index
    %c0_4 = arith.constant 0 : index
    %4 = vector.load %arg3[%c0_3, %c0_4] : memref<1x512xf32, #tpu.memory_space<vmem>>, vector<1x512xf32>
    %5 = vector.broadcast %4 : vector<1x512xf32> to vector<32x512xf32>
    %6 = arith.addf %3, %5 : vector<32x512xf32>
    %cst = arith.constant 0.000000e+00 : f32
    %7 = vector.broadcast %cst : f32 to vector<32x512xf32>
    %8 = arith.maximumf %6, %7 : vector<32x512xf32>
    %c0_5 = arith.constant 0 : index
    %c0_6 = arith.constant 0 : index
    %9 = vector.load %arg4[%c0_5, %c0_6] : memref<32x512xf32, #tpu.memory_space<vmem>>, vector<32x512xf32>
    tpu.vector_store %arg4[%c0_5, %c0_6], %8 {strides = array<i32>} : memref<32x512xf32, #tpu.memory_space<vmem>>, vector<32x512xf32>,
    return
  }
  func.func @transform_0(%arg0: i32) -> (i32, i32) {
    %c0_i32 = arith.constant 0 : i32
    %c0_i32_0 = arith.constant 0 : i32
    return %arg0, %c0_i32 : i32, i32
  }
  func.func @transform_1(%arg0: i32) -> (i32, i32) {
    %c0_i32 = arith.constant 0 : i32
    %c0_i32_0 = arith.constant 0 : i32
    %c0_i32_1 = arith.constant 0 : i32
    return %c0_i32, %c0_i32_0 : i32, i32
  }
  func.func @transform_2(%arg0: i32) -> (i32, i32) {
    %c0_i32 = arith.constant 0 : i32
    %c0_i32_0 = arith.constant 0 : i32
    %c0_i32_1 = arith.constant 0 : i32
    return %c0_i32, %c0_i32_0 : i32, i32
  }
  func.func @transform_3(%arg0: i32) -> (i32, i32) {
    %c0_i32 = arith.constant 0 : i32
    %c0_i32_0 = arith.constant 0 : i32
    return %arg0, %c0_i32 : i32, i32
  }
}

</mosaic_0001>

<llo_original>
// kernel: tile.18
$region0: #{tile.18}
  #allocation0 [shape = 's32[1]{0}', space=sflag, size = 0x4, scoped, tag = 'scoped memory for tile.18']
  %s0 = inlined_call_operand.vmem [shape: f32[8], index: 0, kind: input, shape index: {}]
  %s1 = inlined_call_operand.vmem [shape: f32[64,8], index: 1, kind: output, shape index: {}]
  // Predicated region
  $region2: #{tile.18} parent=0 // pred_check
    _
  $region3: #{tile.18} parent=0 // pred_check_branch
    %3 = sbr.rel (0) target = $region5
  $region4: #{tile.18} parent=0 // pred_region
    _
  $region5: #{tile.18} parent=0 // pred_fallthru
    _
  %v4 = vld [vmem:[%s0] ss:$0 sm:$0xff]
  %5 = vst [vmem:[%s1] sm:$0xff] %v4
  %s6 = scalar_lea.vmem %s1, 8
  %7 = vst [vmem:[%s6] sm:$0xff] %v4
  %s8 = scalar_lea.vmem %s1, 16
  %9 = vst [vmem:[%s8] sm:$0xff] %v4
  %s10 = scalar_lea.vmem %s1, 24
  %11 = vst [vmem:[%s10] sm:$0xff] %v4
  %s12 = scalar_lea.vmem %s1, 32
  %13 = vst [vmem:[%s12] sm:$0xff] %v4
  %s14 = scalar_lea.vmem %s1, 40
  %15 = vst [vmem:[%s14] sm:$0xff] %v4
  %s16 = scalar_lea.vmem %s1, 48
  %17 = vst [vmem:[%s16] sm:$0xff] %v4
  %s18 = scalar_lea.vmem %s1, 56
  %19 = vst [vmem:[%s18] sm:$0xff] %v4

// kernel: tile.19
$region0: #{tile.19}
  %s0 = inlined_call_operand.vmem [shape: f32[64,8], index: 0, kind: input, shape index: {}]
  %s1 = inlined_call_operand.vmem [shape: f32[1,512], index: 1, kind: output, shape index: {}]
  $region1: #{tile.19} parent=0
    #allocation0 [shape = 'u8[16384]{0}', space=vmem, size = 0x4000, scoped, tag = 'scoped mem for output reshape']
    %s2 = smov 3
    %v3 = vld [vmem:[%s0] ss:$16 sm:%s2]
    %s4 = smov 12
    %v5 = vld [vmem:[%s0] ss:$16 sm:%s4]
    %vm6 = vcmask 1043458
    %v7 = vsel %vm6, %v5, %v3
    %vm8 = vcmask 64512
    %9 = vst.msk [vmem:[#allocation0] ss:$8 sm:$0xf] %vm8, %v7
    %s10 = scalar_lea.vmem %s0, 15
    %s11 = smov 3
    %v12 = vld [vmem:[%s10] ss:$16 sm:%s11]
    %s13 = scalar_lea.vmem %s0, 15
    %s14 = smov 12
    %v15 = vld [vmem:[%s13] ss:$16 sm:%s14]
    %vm16 = vcmask 1043458
    %v17 = vsel %vm16, %v15, %v12
    %18 = vrot.lane.b32.xlu0 %v17, 120
    %v19 = vpop.permute.xlu0 %18
    %vm20 = vcmask 1048512
    %21 = vst.msk [vmem:[#allocation0] ss:$8 sm:$0xf] %vm20, %v19
    %s22 = scalar_lea.vmem %s0, 14
    %s23 = smov 3
    %v24 = vld [vmem:[%s22] ss:$16 sm:%s23]
    %s25 = scalar_lea.vmem %s0, 14
    %s26 = smov 12
    %v27 = vld [vmem:[%s25] ss:$16 sm:%s26]
    %vm28 = vcmask 1043458
    %v29 = vsel %vm28, %v27, %v24
    %30 = vrot.lane.b32.xlu0 %v29, 112
    %v31 = vpop.permute.xlu0 %30
    %vm32 = vcmask 982912
    %33 = vst.msk [vmem:[#allocation0] ss:$8 sm:$0xf] %vm32, %v31
    %s34 = scalar_lea.vmem %s0, 13
    %s35 = smov 3
    %v36 = vld [vmem:[%s34] ss:$16 sm:%s35]
    %s37 = scalar_lea.vmem %s0, 13
    %s38 = smov 12
    %v39 = vld [vmem:[%s37] ss:$16 sm:%s38]
    %vm40 = vcmask 1043458
    %v41 = vsel %vm40, %v39, %v36
    %42 = vrot.lane.b32.xlu0 %v41, 104
    %v43 = vpop.permute.xlu0 %42
    %vm44 = vcmask 917312
    %45 = vst.msk [vmem:[#allocation0] ss:$8 sm:$0xf] %vm44, %v43
    %s46 = scalar_lea.vmem %s0, 12
    %s47 = smov 3
    %v48 = vld [vmem:[%s46] ss:$16 sm:%s47]
    %s49 = scalar_lea.vmem %s0, 12
    %s50 = smov 12
    %v51 = vld [vmem:[%s49] ss:$16 sm:%s50]
    %vm52 = vcmask 1043458
    %v53 = vsel %vm52, %v51, %v48
    %54 = vrot.lane.b32.xlu0 %v53, 96
    %v55 = vpop.permute.xlu0 %54
    %vm56 = vcmask 851712
    %57 = vst.msk [vmem:[#allocation0] ss:$8 sm:$0xf] %vm56, %v55
    %s58 = scalar_lea.vmem %s0, 11
    %s59 = smov 3
    %v60 = vld [vmem:[%s58] ss:$16 sm:%s59]
    %s61 = scalar_lea.vmem %s0, 11
    %s62 = smov 12
    %v63 = vld [vmem:[%s61] ss:$16 sm:%s62]
    %vm64 = vcmask 1043458
    %v65 = vsel %vm64, %v63, %v60
    %66 = vrot.lane.b32.xlu0 %v65, 88
    %v67 = vpop.permute.xlu0 %66
    %vm68 = vcmask 786112
    %69 = vst.msk [vmem:[#allocation0] ss:$8 sm:$0xf] %vm68, %v67
    %s70 = scalar_lea.vmem %s0, 10
    %s71 = smov 3
    %v72 = vld [vmem:[%s70] ss:$16 sm:%s71]
    %s73 = scalar_lea.vmem %s0, 10
    %s74 = smov 12
    %v75 = vld [vmem:[%s73] ss:$16 sm:%s74]
    %vm76 = vcmask 1043458
    %v77 = vsel %vm76, %v75, %v72
    %78 = vrot.lane.b32.xlu0 %v77, 80
    %v79 = vpop.permute.xlu0 %78
    %vm80 = vcmask 720512
    %81 = vst.msk [vmem:[#allocation0] ss:$8 sm:$0xf] %vm80, %v79
    %s82 = scalar_lea.vmem %s0, 9
    %s83 = smov 3
    %v84 = vld [vmem:[%s82] ss:$16 sm:%s83]
    %s85 = scalar_lea.vmem %s0, 9
    %s86 = smov 12
    %v87 = vld [vmem:[%s85] ss:$16 sm:%s86]
    %vm88 = vcmask 1043458
    %v89 = vsel %vm88, %v87, %v84
    %90 = vrot.lane.b32.xlu0 %v89, 72
    %v91 = vpop.permute.xlu0 %90
    %vm92 = vcmask 654912
    %93 = vst.msk [vmem:[#allocation0] ss:$8 sm:$0xf] %vm92, %v91
    %s94 = scalar_lea.vmem %s0, 8
    %s95 = smov 3
    %v96 = vld [vmem:[%s94] ss:$16 sm:%s95]
    %s97 = scalar_lea.vmem %s0, 8
    %s98 = smov 12
    %v99 = vld [vmem:[%s97] ss:$16 sm:%s98]
    %vm100 = vcmask 1043458
    %v101 = vsel %vm100, %v99, %v96
    %102 = vrot.lane.b32.xlu0 %v101, 64
    %v103 = vpop.permute.xlu0 %102
    %vm104 = vcmask 589312
    %105 = vst.msk [vmem:[#allocation0] ss:$8 sm:$0xf] %vm104, %v103
    %s106 = scalar_lea.vmem %s0, 7
    %s107 = smov 3
    %v108 = vld [vmem:[%s106] ss:$16 sm:%s107]
    %s109 = scalar_lea.vmem %s0, 7
    %s110 = smov 12
    %v111 = vld [vmem:[%s109] ss:$16 sm:%s110]
    %vm112 = vcmask 1043458
    %v113 = vsel %vm112, %v111, %v108
    %114 = vrot.lane.b32.xlu0 %v113, 56
    %v115 = vpop.permute.xlu0 %114
    %vm116 = vcmask 523712
    %117 = vst.msk [vmem:[#allocation0] ss:$8 sm:$0xf] %vm116, %v115
    %s118 = scalar_lea.vmem %s0, 6
    %s119 = smov 3
    %v120 = vld [vmem:[%s118] ss:$16 sm:%s119]
    %s121 = scalar_lea.vmem %s0, 6
    %s122 = smov 12
    %v123 = vld [vmem:[%s121] ss:$16 sm:%s122]
    %vm124 = vcmask 1043458
    %v125 = vsel %vm124, %v123, %v120
    %126 = vrot.lane.b32.xlu0 %v125, 48
    %v127 = vpop.permute.xlu0 %126
    %vm128 = vcmask 458112
    %129 = vst.msk [vmem:[#allocation0] ss:$8 sm:$0xf] %vm128, %v127
    %s130 = scalar_lea.vmem %s0, 5
    %s131 = smov 3
    %v132 = vld [vmem:[%s130] ss:$16 sm:%s131]
    %s133 = scalar_lea.vmem %s0, 5
    %s134 = smov 12
    %v135 = vld [vmem:[%s133] ss:$16 sm:%s134]
    %vm136 = vcmask 1043458
    %v137 = vsel %vm136, %v135, %v132
    %138 = vrot.lane.b32.xlu0 %v137, 40
    %v139 = vpop.permute.xlu0 %138
    %vm140 = vcmask 392512
    %141 = vst.msk [vmem:[#allocation0] ss:$8 sm:$0xf] %vm140, %v139
    %s142 = scalar_lea.vmem %s0, 4
    %s143 = smov 3
    %v144 = vld [vmem:[%s142] ss:$16 sm:%s143]
    %s145 = scalar_lea.vmem %s0, 4
    %s146 = smov 12
    %v147 = vld [vmem:[%s145] ss:$16 sm:%s146]
    %vm148 = vcmask 1043458
    %v149 = vsel %vm148, %v147, %v144
    %150 = vrot.lane.b32.xlu0 %v149, 32
    %v151 = vpop.permute.xlu0 %150
    %vm152 = vcmask 326912
    %153 = vst.msk [vmem:[#allocation0] ss:$8 sm:$0xf] %vm152, %v151
    %s154 = scalar_lea.vmem %s0, 3
    %s155 = smov 3
    %v156 = vld [vmem:[%s154] ss:$16 sm:%s155]
    %s157 = scalar_lea.vmem %s0, 3
    %s158 = smov 12
    %v159 = vld [vmem:[%s157] ss:$16 sm:%s158]
    %vm160 = vcmask 1043458
    %v161 = vsel %vm160, %v159, %v156
    %162 = vrot.lane.b32.xlu0 %v161, 24
    %v163 = vpop.permute.xlu0 %162
    %vm164 = vcmask 261312
    %165 = vst.msk [vmem:[#allocation0] ss:$8 sm:$0xf] %vm164, %v163
    %s166 = scalar_lea.vmem %s0, 2
    %s167 = smov 3
    %v168 = vld [vmem:[%s166] ss:$16 sm:%s167]
    %s169 = scalar_lea.vmem %s0, 2
    %s170 = smov 12
    %v171 = vld [vmem:[%s169] ss:$16 sm:%s170]
    %vm172 = vcmask 1043458
    %v173 = vsel %vm172, %v171, %v168
    %174 = vrot.lane.b32.xlu0 %v173, 16
    %v175 = vpop.permute.xlu0 %174
    %vm176 = vcmask 195712
    %177 = vst.msk [vmem:[#allocation0] ss:$8 sm:$0xf] %vm176, %v175
    %s178 = scalar_lea.vmem %s0, 1
    %s179 = smov 3
    %v180 = vld [vmem:[%s178] ss:$16 sm:%s179]
    %s181 = scalar_lea.vmem %s0, 1
    %s182 = smov 12
    %v183 = vld [vmem:[%s181] ss:$16 sm:%s182]
    %vm184 = vcmask 1043458
    %v185 = vsel %vm184, %v183, %v180
    %186 = vrot.lane.b32.xlu0 %v185, 8
    %v187 = vpop.permute.xlu0 %186
    %vm188 = vcmask 130112
    %189 = vst.msk [vmem:[#allocation0] ss:$8 sm:$0xf] %vm188, %v187
    %s191 = sshllo.u32 0, 1
    %v193 = vld [vmem:[#allocation0] sm:%s191]
    %s194 = sshllo.u32 0, 1
    %195 = vst [vmem:[%s1] sm:%s194] %v193
    %s196 = scalar_lea.vmem [#allocation0], 8
    %v197 = vld [vmem:[%s196] sm:%s191]
    %s198 = sshllo.u32 0, 1
    %s199 = scalar_lea.vmem %s1, 1
    %200 = vst [vmem:[%s199] sm:%s198] %v197
    %s201 = scalar_lea.vmem [#allocation0], 16
    %v202 = vld [vmem:[%s201] sm:%s191]
    %s203 = sshllo.u32 0, 1
    %s204 = smul.addr 1, 2
    %s205 = scalar_lea.vmem %s1, %s204
    %206 = vst [vmem:[%s205] sm:%s203] %v202
    %s207 = scalar_lea.vmem [#allocation0], 24
    %v208 = vld [vmem:[%s207] sm:%s191]
    %s209 = sshllo.u32 0, 1
    %s210 = smul.addr 1, 3
    %s211 = scalar_lea.vmem %s1, %s210
    %212 = vst [vmem:[%s211] sm:%s209] %v208

// kernel: _lambda_.3
$region0: #{_lambda_.3}
  #allocation0 [shape = 'u32[]', space=smem, size = 0x4, offset = 0x4, fixed_abs, tag = 'smem constant byte address 0x4 - core index']
  #allocation1 [shape = 'u32[144,128]{1,0:T(1,128)}', space=vmem, size = 0x12000, scoped, tag = 'internal scratch']
  %s0 = inlined_call_operand.vmem [shape: f32[32,512], index: 0, kind: input, shape index: {}, may-alias: {0,3}]
  %s1 = inlined_call_operand.vmem [shape: f32[1,512], index: 1, kind: input, shape index: {}]
  %s2 = inlined_call_operand.vmem [shape: f32[1,512], index: 2, kind: input, shape index: {}]
  %s3 = inlined_call_operand.vmem [shape: f32[32,512], index: 3, kind: output, shape index: {}, may-alias: {0,3}]
  %s4 = sld [smem:[#allocation0]]
  $region22: #{_lambda_.3} parent=0
    _
  %s6 = ssub.s32 1, %s4
  %s7 = scalar_select 0, %s6, %s4
  // Predicated region
  $region2: #{_lambda_.3} parent=0 // pred_check
    _
  $region3: #{_lambda_.3} parent=0 // pred_check_branch
    %9 = sbr.rel (0) target = $region5
  $region4: #{_lambda_.3} parent=0 // pred_region
    _
  $region5: #{_lambda_.3} parent=0 // pred_fallthru
    _
  // Predicated region
  $region6: #{_lambda_.3} parent=0 // pred_check
    _
  $region7: #{_lambda_.3} parent=0 // pred_check_branch
    %11 = sbr.rel (0) target = $region9
  $region8: #{_lambda_.3} parent=0 // pred_region
    _
  $region9: #{_lambda_.3} parent=0 // pred_fallthru
    _
  // Predicated region
  $region10: #{_lambda_.3} parent=0 // pred_check
    _
  $region11: #{_lambda_.3} parent=0 // pred_check_branch
    %13 = sbr.rel (0) target = $region13
  $region12: #{_lambda_.3} parent=0 // pred_region
    _
  $region13: #{_lambda_.3} parent=0 // pred_fallthru
    _
  %v14 = vld [vmem:[%s0] sm:$0xff]
  %v15 = vld [vmem:[%s0 + $0x8] sm:$0xff]
  %v16 = vld [vmem:[%s0 + $0x10] sm:$0xff]
  %v17 = vld [vmem:[%s0 + $0x18] sm:$0xff]
  %v18 = vld [vmem:[%s0 + $0x20] sm:$0xff]
  %v19 = vld [vmem:[%s0 + $0x28] sm:$0xff]
  %v20 = vld [vmem:[%s0 + $0x30] sm:$0xff]
  %v21 = vld [vmem:[%s0 + $0x38] sm:$0xff]
  %v22 = vld [vmem:[%s0 + $0x40] sm:$0xff]
  %v23 = vld [vmem:[%s0 + $0x48] sm:$0xff]
  %v24 = vld [vmem:[%s0 + $0x50] sm:$0xff]
  %v25 = vld [vmem:[%s0 + $0x58] sm:$0xff]
  %v26 = vld [vmem:[%s0 + $0x60] sm:$0xff]
  %v27 = vld [vmem:[%s0 + $0x68] sm:$0xff]
  %v28 = vld [vmem:[%s0 + $0x70] sm:$0xff]
  %v29 = vld [vmem:[%s0 + $0x78] sm:$0xff]
  %v30 = vld [vmem:[%s1] sm:$0xf]
  %v32 = vlaneseq
  %v33 = vshrl.u32 %v32, 7
  %v34 = vsub.s32 0, %v33
  %v35 = vrot.slane %v30, %v34
  %v36 = vlaneseq
  %v37 = vshrl.u32 %v36, 7
  %v38 = vsub.s32 1, %v37
  %v39 = vrot.slane %v30, %v38
  %v40 = vlaneseq
  %v41 = vshrl.u32 %v40, 7
  %v42 = vsub.s32 2, %v41
  %v43 = vrot.slane %v30, %v42
  %v44 = vlaneseq
  %v45 = vshrl.u32 %v44, 7
  %v46 = vsub.s32 3, %v45
  %v47 = vrot.slane %v30, %v46
  %v52 = vmul.f32 %v14, %v35
  %v53 = vmul.f32 %v15, %v39
  %v54 = vmul.f32 %v16, %v43
  %v55 = vmul.f32 %v17, %v47
  %v56 = vmul.f32 %v18, %v35
  %v57 = vmul.f32 %v19, %v39
  %v58 = vmul.f32 %v20, %v43
  %v59 = vmul.f32 %v21, %v47
  %v60 = vmul.f32 %v22, %v35
  %v61 = vmul.f32 %v23, %v39
  %v62 = vmul.f32 %v24, %v43
  %v63 = vmul.f32 %v25, %v47
  %v64 = vmul.f32 %v26, %v35
  %v65 = vmul.f32 %v27, %v39
  %v66 = vmul.f32 %v28, %v43
  %v67 = vmul.f32 %v29, %v47
  %v68 = vld [vmem:[%s2] sm:$0xf]
  %v70 = vlaneseq
  %v71 = vshrl.u32 %v70, 7
  %v72 = vsub.s32 0, %v71
  %v73 = vrot.slane %v68, %v72
  %v74 = vlaneseq
  %v75 = vshrl.u32 %v74, 7
  %v76 = vsub.s32 1, %v75
  %v77 = vrot.slane %v68, %v76
  %v78 = vlaneseq
  %v79 = vshrl.u32 %v78, 7
  %v80 = vsub.s32 2, %v79
  %v81 = vrot.slane %v68, %v80
  %v82 = vlaneseq
  %v83 = vshrl.u32 %v82, 7
  %v84 = vsub.s32 3, %v83
  %v85 = vrot.slane %v68, %v84
  %v90 = vadd.f32 %v52, %v73
  %v91 = vadd.f32 %v53, %v77
  %v92 = vadd.f32 %v54, %v81
  %v93 = vadd.f32 %v55, %v85
  %v94 = vadd.f32 %v56, %v73
  %v95 = vadd.f32 %v57, %v77
  %v96 = vadd.f32 %v58, %v81
  %v97 = vadd.f32 %v59, %v85
  %v98 = vadd.f32 %v60, %v73
  %v99 = vadd.f32 %v61, %v77
  %v100 = vadd.f32 %v62, %v81
  %v101 = vadd.f32 %v63, %v85
  %v102 = vadd.f32 %v64, %v73
  %v103 = vadd.f32 %v65, %v77
  %v104 = vadd.f32 %v66, %v81
  %v105 = vadd.f32 %v67, %v85
  %v106 = vmax.f32 %v90, 0.0
  %v107 = vmax.f32 %v91, 0.0
  %v108 = vmax.f32 %v92, 0.0
  %v109 = vmax.f32 %v93, 0.0
  %v110 = vmax.f32 %v94, 0.0
  %v111 = vmax.f32 %v95, 0.0
  %v112 = vmax.f32 %v96, 0.0
  %v113 = vmax.f32 %v97, 0.0
  %v114 = vmax.f32 %v98, 0.0
  %v115 = vmax.f32 %v99, 0.0
  %v116 = vmax.f32 %v100, 0.0
  %v117 = vmax.f32 %v101, 0.0
  %v118 = vmax.f32 %v102, 0.0
  %v119 = vmax.f32 %v103, 0.0
  %v120 = vmax.f32 %v104, 0.0
  %v121 = vmax.f32 %v105, 0.0
  %122 = vst [vmem:[%s3] sm:$0xff] %v106
  %123 = vst [vmem:[%s3 + $0x8] sm:$0xff] %v107
  %124 = vst [vmem:[%s3 + $0x10] sm:$0xff] %v108
  %125 = vst [vmem:[%s3 + $0x18] sm:$0xff] %v109
  %126 = vst [vmem:[%s3 + $0x20] sm:$0xff] %v110
  %127 = vst [vmem:[%s3 + $0x28] sm:$0xff] %v111
  %128 = vst [vmem:[%s3 + $0x30] sm:$0xff] %v112
  %129 = vst [vmem:[%s3 + $0x38] sm:$0xff] %v113
  %130 = vst [vmem:[%s3 + $0x40] sm:$0xff] %v114
  %131 = vst [vmem:[%s3 + $0x48] sm:$0xff] %v115
  %132 = vst [vmem:[%s3 + $0x50] sm:$0xff] %v116
  %133 = vst [vmem:[%s3 + $0x58] sm:$0xff] %v117
  %134 = vst [vmem:[%s3 + $0x60] sm:$0xff] %v118
  %135 = vst [vmem:[%s3 + $0x68] sm:$0xff] %v119
  %136 = vst [vmem:[%s3 + $0x70] sm:$0xff] %v120
  %137 = vst [vmem:[%s3 + $0x78] sm:$0xff] %v121
  // Predicated region
  $region14: #{_lambda_.3} parent=0 // pred_check
    _
  $region15: #{_lambda_.3} parent=0 // pred_check_branch
    %139 = sbr.rel (0) target = $region17
  $region16: #{_lambda_.3} parent=0 // pred_region
    _
  $region17: #{_lambda_.3} parent=0 // pred_fallthru
    _
  // Predicated region
  $region18: #{_lambda_.3} parent=0 // pred_check
    _
  $region19: #{_lambda_.3} parent=0 // pred_check_branch
    %141 = sbr.rel (0) target = $region21
  $region20: #{_lambda_.3} parent=0 // pred_region
    _
  $region21: #{_lambda_.3} parent=0 // pred_fallthru
    _

// kernel: _lambda_.2
$region0: #{_lambda_.2}
  #allocation0 [shape = 'u32[]', space=smem, size = 0x4, offset = 0x4, fixed_abs, tag = 'smem constant byte address 0x4 - core index']
  #allocation1 [shape = 'u32[144,128]{1,0:T(1,128)}', space=vmem, size = 0x12000, scoped, tag = 'internal scratch']
  #allocation2 [shape = 'f32[18,18,4]{2,1,0:T(8,128)}', space=vmem, size = 0x36000, scoped, tag = 'scratch operand']
  %s0 = inlined_call_operand.vmem [shape: f32[2,16,16,4], index: 0, kind: input, shape index: {}]
  %s1 = inlined_call_operand.vmem [shape: f32[36,32], index: 1, kind: input, shape index: {}]
  %s2 = inlined_call_operand.vmem [shape: f32[2,256,32], index: 2, kind: output, shape index: {0}]
  %s3 = inlined_call_operand.vmem [shape: f32[2,2,32], index: 3, kind: output, shape index: {1}]
  %4 = xla_tuple %s2, %s3
  %s5 = sld [smem:[#allocation0]]
  $region49: #{_lambda_.2} parent=0
    _
  %s7 = ssub.s32 1, %s5
  %s8 = scalar_select 0, %s7, %s5
  loop: start=0, step=1, limit=4
  $region2: #{_lambda_.2} parent=0 // loop_pre_header
    _
  $region3: #{_lambda_.2} parent=0 // loop_header
    %s10 = sphi 0, %s14
    %p11 = scmp.ge.s32.totalorder %s10, 4
    %s20 = sphi 0, %s22
    %s23 = sphi 0, %s20
    %s24 = sphi 0, %s23
    %s40 = sphi 0, %s24
    %s44 = sphi 0, %s44
    %s46 = sphi 0, %s44
    %s47 = sphi 0, %s46
    %s61 = sphi 0, %s47
    %s67 = sphi 0, %s69
    %s70 = sphi 0, %s67
    %s71 = sphi 0, %s70
    %s87 = sphi 0, %s71
    %s93 = sphi 0, %s95
    %s96 = sphi 0, %s93
    %s97 = sphi 0, %s96
    %s113 = sphi 0, %s97
  $region4: #{_lambda_.2} parent=0 // loop_header_branch
    %13 = sbr.rel (%p11) target = $region8
  $region5: #{_lambda_.2} parent=0 // loop_body
    %s15 = ssub.s32 %s10, 1
    %s16 = ssub.s32 %s10, 2
    %s17 = sadd.s32 %s10, 1
    %s18 = ssub.s32 %s10, %s17
    %p19 = scmp.eq.s32.totalorder %s18, 0
    %s21 = sadd.s32 %s20, 1
    %s22 = scalar_select %p19, %s20, %s21
    %p25 = pneg %p19
    %p26 = scmp.eq.s32.totalorder %s10, 1
    %p27 = por %p25, %p26
    %p28 = scmp.ne.s32.totalorder %s20, %s23
    %p29 = scmp.eq.s32.totalorder %s10, 0
    %p30 = por %p28, %p29
    %p31 = scmp.ne.s32.totalorder %s20, %s23
    %p32 = scmp.eq.s32.totalorder %s15, 1
    %p33 = por %p31, %p32
    %p34 = scmp.ne.s32.totalorder %s23, %s24
    %p35 = scmp.eq.s32.totalorder %s15, 0
    %p36 = por %p34, %p35
    %p37 = scmp.ne.s32.totalorder %s23, %s24
    %p38 = scmp.eq.s32.totalorder %s16, 1
    %p39 = por %p37, %p38
    %p41 = scmp.ne.s32.totalorder %s24, %s40
    %p42 = scmp.eq.s32.totalorder %s16, 0
    %p43 = por %p41, %p42
    %s45 = sadd.s32 %s44, 1
    %p48 = scmp.eq.s32.totalorder %s10, 1
    %p49 = scmp.ne.s32.totalorder %s44, %s46
    %p50 = scmp.eq.s32.totalorder %s10, 0
    %p51 = por %p49, %p50
    %p52 = scmp.ne.s32.totalorder %s44, %s46
    %p53 = scmp.eq.s32.totalorder %s15, 1
    %p54 = por %p52, %p53
    %p55 = scmp.ne.s32.totalorder %s46, %s47
    %p56 = scmp.eq.s32.totalorder %s15, 0
    %p57 = por %p55, %p56
    %p58 = scmp.ne.s32.totalorder %s46, %s47
    %p59 = scmp.eq.s32.totalorder %s16, 1
    %p60 = por %p58, %p59
    %p62 = scmp.ne.s32.totalorder %s47, %s61
    %p63 = scmp.eq.s32.totalorder %s16, 0
    %p64 = por %p62, %p63
    %s65 = ssub.s32 %s10, %s17
    %p66 = scmp.eq.s32.totalorder %s65, 0
    %s68 = sadd.s32 %s67, 1
    %s69 = scalar_select %p66, %s67, %s68
    %p72 = pneg %p66
    %p73 = scmp.eq.s32.totalorder %s10, 1
    %p74 = por %p72, %p73
    %p75 = scmp.ne.s32.totalorder %s67, %s70
    %p76 = scmp.eq.s32.totalorder %s10, 0
    %p77 = por %p75, %p76
    %p78 = scmp.ne.s32.totalorder %s67, %s70
    %p79 = scmp.eq.s32.totalorder %s15, 1
    %p80 = por %p78, %p79
    %p81 = scmp.ne.s32.totalorder %s70, %s71
    %p82 = scmp.eq.s32.totalorder %s15, 0
    %p83 = por %p81, %p82
    %p84 = scmp.ne.s32.totalorder %s70, %s71
    %p85 = scmp.eq.s32.totalorder %s16, 1
    %p86 = por %p84, %p85
    %p88 = scmp.ne.s32.totalorder %s71, %s87
    %p89 = scmp.eq.s32.totalorder %s16, 0
    %p90 = por %p88, %p89
    %s91 = ssub.s32 %s10, %s17
    %p92 = scmp.eq.s32.totalorder %s91, 0
    %s94 = sadd.s32 %s93, 1
    %s95 = scalar_select %p92, %s93, %s94
    %p98 = pneg %p92
    %p99 = scmp.eq.s32.totalorder %s10, 1
    %p100 = por %p98, %p99
    %p101 = scmp.ne.s32.totalorder %s93, %s96
    %p102 = scmp.eq.s32.totalorder %s10, 0
    %p103 = por %p101, %p102
    %p104 = scmp.ne.s32.totalorder %s93, %s96
    %p105 = scmp.eq.s32.totalorder %s15, 1
    %p106 = por %p104, %p105
    %p107 = scmp.ne.s32.totalorder %s96, %s97
    %p108 = scmp.eq.s32.totalorder %s15, 0
    %p109 = por %p107, %p108
    %p110 = scmp.ne.s32.totalorder %s96, %s97
    %p111 = scmp.eq.s32.totalorder %s16, 1
    %p112 = por %p110, %p111
    %p114 = scmp.ne.s32.totalorder %s97, %s113
    %p115 = scmp.eq.s32.totalorder %s16, 0
    %p116 = por %p114, %p115
    %p117 = scmp.le.s32.totalorder 1, %s10
    %p118 = scmp.lt.s32.totalorder %s10, 3
    %p119 = pnand %p117, %p118
    %p120 = pneg %p119
    // Predicated region
    $region9: #{_lambda_.2} parent=5 // pred_check
      _
    $region10: #{_lambda_.2} parent=5 // pred_check_branch
      %122 = sbr.rel (%p119) target = $region12
    $region11: #{_lambda_.2} parent=5 // pred_region
      %s123 = ssub.s32 %s10, 1
      // Predicated region
      $region13: #{_lambda_.2} parent=11 // pred_check
        %p124 = pneg %p57
      $region14: #{_lambda_.2} parent=11 // pred_check_branch
        %126 = sbr.rel (%p124) target = $region16
      $region15: #{_lambda_.2} parent=11 // pred_region
        _
      $region16: #{_lambda_.2} parent=11 // pred_fallthru
        _
    $region12: #{_lambda_.2} parent=5 // pred_fallthru
      _
    %p127 = scmp.lt.s32.totalorder %s10, 2
    // Predicated region
    $region17: #{_lambda_.2} parent=5 // pred_check
      %p128 = pneg %p127
    $region18: #{_lambda_.2} parent=5 // pred_check_branch
      %130 = sbr.rel (%p128) target = $region20
    $region19: #{_lambda_.2} parent=5 // pred_region
      // Predicated region
      $region21: #{_lambda_.2} parent=19 // pred_check
        %p131 = pneg %p30
      $region22: #{_lambda_.2} parent=19 // pred_check_branch
        %133 = sbr.rel (%p131) target = $region24
      $region23: #{_lambda_.2} parent=19 // pred_region
        %p134 = scmp.lt.s32.totalorder %s10, 1
        %s135 = scalar_select %p134, %s10, 1
        %s136 = smul.addr %s135, 32
        %s137 = smul.addr %s136, 8
        %s138 = scalar_lea.vmem %s0, %s137
      $region24: #{_lambda_.2} parent=19 // pred_fallthru
        _
    $region20: #{_lambda_.2} parent=5 // pred_fallthru
      _
    %p139 = scmp.le.s32.totalorder 1, %s10
    %p140 = scmp.lt.s32.totalorder %s10, 3
    %p141 = pnand %p139, %p140
    %p142 = pneg %p141
    // Predicated region
    $region25: #{_lambda_.2} parent=5 // pred_check
      _
    $region26: #{_lambda_.2} parent=5 // pred_check_branch
      %144 = sbr.rel (%p141) target = $region28
    $region27: #{_lambda_.2} parent=5 // pred_region
      %s145 = ssub.s32 %s10, 1
      %p146 = scmp.lt.s32.totalorder %s15, 1
      %s147 = scalar_select %p146, %s15, 1
      %s148 = smul.addr %s147, 32
      %s149 = smul.addr %s148, 8
      %s150 = scalar_lea.vmem %s0, %s149
      %p151 = pneg %p36
      %p152 = pneg %p33
      %p153 = pneg %p57
      %p154 = pneg %p54
      %p155 = pneg %p83
      %p156 = pneg %p80
      %p157 = scmp.lt.s32.totalorder %s15, 1
      %s158 = scalar_select %p157, %s15, 1
      %s159 = smul.addr %s158, 32
      %s160 = smul.addr %s159, 8
      %s161 = scalar_lea.vmem %s2, %s160
      %p162 = pneg %p109
      %p163 = pneg %p106
      %p164 = scmp.lt.s32.totalorder %s15, 1
      %s165 = scalar_select %p164, %s15, 1
      %s166 = smul.addr %s165, 2
      %s167 = scalar_lea.vmem %s3, %s166
      %p168 = scmp.lt.s32.totalorder %s15, 1
      %s169 = scalar_select %p168, %s15, 1
      %s170 = smul.addr %s169, 32
      %s171 = smul.addr %s170, 8
      %s172 = scalar_lea.vmem %s0, %s171
      %p173 = scmp.lt.s32.totalorder %s15, 1
      %s174 = scalar_select %p173, %s15, 1
      %s175 = smul.addr %s174, 32
      %s176 = smul.addr %s175, 8
      %s177 = scalar_lea.vmem %s2, %s176
      %p178 = scmp.lt.s32.totalorder %s15, 1
      %s179 = scalar_select %p178, %s15, 1
      %s180 = smul.addr %s179, 2
      %s181 = scalar_lea.vmem %s3, %s180
      %vm182 = vcmask 31744
      %183 = vst.msk [vmem:[#allocation2] sm:$0xff] %vm182, 0.0
      %184 = vst.msk [vmem:[#allocation2 + $0x8] sm:$0xff] %vm182, 0.0
      %vm185 = vcmask 25600
      %186 = vst.msk [vmem:[#allocation2 + $0x10] sm:$0x3] %vm185, 0.0
      %187 = vst.msk [vmem:[#allocation2 + $0x18] sm:$0xff] %vm182, 0.0
      %188 = vst.msk [vmem:[#allocation2 + $0x20] sm:$0xff] %vm182, 0.0
      %189 = vst.msk [vmem:[#allocation2 + $0x28] sm:$0x3] %vm185, 0.0
      %190 = vst.msk [vmem:[#allocation2 + $0x30] sm:$0xff] %vm182, 0.0
      %191 = vst.msk [vmem:[#allocation2 + $0x38] sm:$0xff] %vm182, 0.0
      %192 = vst.msk [vmem:[#allocation2 + $0x40] sm:$0x3] %vm185, 0.0
      %193 = vst.msk [vmem:[#allocation2 + $0x48] sm:$0xff] %vm182, 0.0
      %194 = vst.msk [vmem:[#allocation2 + $0x50] sm:$0xff] %vm182, 0.0
      %195 = vst.msk [vmem:[#allocation2 + $0x58] sm:$0x3] %vm185, 0.0
      %196 = vst.msk [vmem:[#allocation2 + $0x60] sm:$0xff] %vm182, 0.0
      %197 = vst.msk [vmem:[#allocation2 + $0x68] sm:$0xff] %vm182, 0.0
      %198 = vst.msk [vmem:[#allocation2 + $0x70] sm:$0x3] %vm185, 0.0
      %199 = vst.msk [vmem:[#allocation2 + $0x78] sm:$0xff] %vm182, 0.0
      %200 = vst.msk [vmem:[#allocation2 + $0x80] sm:$0xff] %vm182, 0.0
      %201 = vst.msk [vmem:[#allocation2 + $0x88] sm:$0x3] %vm185, 0.0
      %202 = vst.msk [vmem:[#allocation2 + $0x90] sm:$0xff] %vm182, 0.0
      %203 = vst.msk [vmem:[#allocation2 + $0x98] sm:$0xff] %vm182, 0.0
      %204 = vst.msk [vmem:[#allocation2 + $0xa0] sm:$0x3] %vm185, 0.0
      %205 = vst.msk [vmem:[#allocation2 + $0xa8] sm:$0xff] %vm182, 0.0
      %206 = vst.msk [vmem:[#allocation2 + $0xb0] sm:$0xff] %vm182, 0.0
      %207 = vst.msk [vmem:[#allocation2 + $0xb8] sm:$0x3] %vm185, 0.0
      %208 = vst.msk [vmem:[#allocation2 + $0xc0] sm:$0xff] %vm182, 0.0
      %209 = vst.msk [vmem:[#allocation2 + $0xc8] sm:$0xff] %vm182, 0.0
      %210 = vst.msk [vmem:[#allocation2 + $0xd0] sm:$0x3] %vm185, 0.0
      %211 = vst.msk [vmem:[#allocation2 + $0xd8] sm:$0xff] %vm182, 0.0
      %212 = vst.msk [vmem:[#allocation2 + $0xe0] sm:$0xff] %vm182, 0.0
      %213 = vst.msk [vmem:[#allocation2 + $0xe8] sm:$0x3] %vm185, 0.0
      %214 = vst.msk [vmem:[#allocation2 + $0xf0] sm:$0xff] %vm182, 0.0
      %215 = vst.msk [vmem:[#allocation2 + $0xf8] sm:$0xff] %vm182, 0.0
      %216 = vst.msk [vmem:[#allocation2 + $0x100] sm:$0x3] %vm185, 0.0
      %217 = vst.msk [vmem:[#allocation2 + $0x108] sm:$0xff] %vm182, 0.0
      %218 = vst.msk [vmem:[#allocation2 + $0x110] sm:$0xff] %vm182, 0.0
      %219 = vst.msk [vmem:[#allocation2 + $0x118] sm:$0x3] %vm185, 0.0
      %220 = vst.msk [vmem:[#allocation2 + $0x120] sm:$0xff] %vm182, 0.0
      %221 = vst.msk [vmem:[#allocation2 + $0x128] sm:$0xff] %vm182, 0.0
      %222 = vst.msk [vmem:[#allocation2 + $0x130] sm:$0x3] %vm185, 0.0
      %223 = vst.msk [vmem:[#allocation2 + $0x138] sm:$0xff] %vm182, 0.0
      %224 = vst.msk [vmem:[#allocation2 + $0x140] sm:$0xff] %vm182, 0.0
      %225 = vst.msk [vmem:[#allocation2 + $0x148] sm:$0x3] %vm185, 0.0
      %226 = vst.msk [vmem:[#allocation2 + $0x150] sm:$0xff] %vm182, 0.0
      %227 = vst.msk [vmem:[#allocation2 + $0x158] sm:$0xff] %vm182, 0.0
      %228 = vst.msk [vmem:[#allocation2 + $0x160] sm:$0x3] %vm185, 0.0
      %229 = vst.msk [vmem:[#allocation2 + $0x168] sm:$0xff] %vm182, 0.0
      %230 = vst.msk [vmem:[#allocation2 + $0x170] sm:$0xff] %vm182, 0.0
      %231 = vst.msk [vmem:[#allocation2 + $0x178] sm:$0x3] %vm185, 0.0
      %232 = vst.msk [vmem:[#allocation2 + $0x180] sm:$0xff] %vm182, 0.0
      %233 = vst.msk [vmem:[#allocation2 + $0x188] sm:$0xff] %vm182, 0.0
      %234 = vst.msk [vmem:[#allocation2 + $0x190] sm:$0x3] %vm185, 0.0
      %235 = vst.msk [vmem:[#allocation2 + $0x198] sm:$0xff] %vm182, 0.0
      %236 = vst.msk [vmem:[#allocation2 + $0x1a0] sm:$0xff] %vm182, 0.0
      %237 = vst.msk [vmem:[#allocation2 + $0x1a8] sm:$0x3] %vm185, 0.0
      %v238 = vld [vmem:[%s172] sm:$0xff]
      %v239 = vld [vmem:[%s172 + $0x8] sm:$0xff]
      %v240 = vld [vmem:[%s172 + $0x10] sm:$0xff]
      %v241 = vld [vmem:[%s172 + $0x18] sm:$0xff]
      %v242 = vld [vmem:[%s172 + $0x20] sm:$0xff]
      %v243 = vld [vmem:[%s172 + $0x28] sm:$0xff]
      %v244 = vld [vmem:[%s172 + $0x30] sm:$0xff]
      %v245 = vld [vmem:[%s172 + $0x38] sm:$0xff]
      %v246 = vld [vmem:[%s172 + $0x40] sm:$0xff]
      %v247 = vld [vmem:[%s172 + $0x48] sm:$0xff]
      %v248 = vld [vmem:[%s172 + $0x50] sm:$0xff]
      %v249 = vld [vmem:[%s172 + $0x58] sm:$0xff]
      %v250 = vld [vmem:[%s172 + $0x60] sm:$0xff]
      %v251 = vld [vmem:[%s172 + $0x68] sm:$0xff]
      %v252 = vld [vmem:[%s172 + $0x70] sm:$0xff]
      %v253 = vld [vmem:[%s172 + $0x78] sm:$0xff]
      %v254 = vld [vmem:[%s172 + $0x80] sm:$0xff]
      %v255 = vld [vmem:[%s172 + $0x88] sm:$0xff]
      %v256 = vld [vmem:[%s172 + $0x90] sm:$0xff]
      %v257 = vld [vmem:[%s172 + $0x98] sm:$0xff]
      %v258 = vld [vmem:[%s172 + $0xa0] sm:$0xff]
      %v259 = vld [vmem:[%s172 + $0xa8] sm:$0xff]
      %v260 = vld [vmem:[%s172 + $0xb0] sm:$0xff]
      %v261 = vld [vmem:[%s172 + $0xb8] sm:$0xff]
      %v262 = vld [vmem:[%s172 + $0xc0] sm:$0xff]
      %v263 = vld [vmem:[%s172 + $0xc8] sm:$0xff]
      %v264 = vld [vmem:[%s172 + $0xd0] sm:$0xff]
      %v265 = vld [vmem:[%s172 + $0xd8] sm:$0xff]
      %v266 = vld [vmem:[%s172 + $0xe0] sm:$0xff]
      %v267 = vld [vmem:[%s172 + $0xe8] sm:$0xff]
      %v268 = vld [vmem:[%s172 + $0xf0] sm:$0xff]
      %v269 = vld [vmem:[%s172 + $0xf8] sm:$0xff]
      %s270 = scalar_lea.vmem [#allocation2], 24
      %271 = vst.msk [vmem:[%s270 + $0x1] sm:$0xff] %vm182, %v238
      %272 = vst.msk [vmem:[%s270 + $0x9] sm:$0xff] %vm182, %v239
      %273 = vst.msk [vmem:[%s270 + $0x19] sm:$0xff] %vm182, %v240
      %274 = vst.msk [vmem:[%s270 + $0x21] sm:$0xff] %vm182, %v241
      %275 = vst.msk [vmem:[%s270 + $0x31] sm:$0xff] %vm182, %v242
      %276 = vst.msk [vmem:[%s270 + $0x39] sm:$0xff] %vm182, %v243
      %277 = vst.msk [vmem:[%s270 + $0x49] sm:$0xff] %vm182, %v244
      %278 = vst.msk [vmem:[%s270 + $0x51] sm:$0xff] %vm182, %v245
      %279 = vst.msk [vmem:[%s270 + $0x61] sm:$0xff] %vm182, %v246
      %280 = vst.msk [vmem:[%s270 + $0x69] sm:$0xff] %vm182, %v247
      %281 = vst.msk [vmem:[%s270 + $0x79] sm:$0xff] %vm182, %v248
      %282 = vst.msk [vmem:[%s270 + $0x81] sm:$0xff] %vm182, %v249
      %283 = vst.msk [vmem:[%s270 + $0x91] sm:$0xff] %vm182, %v250
      %284 = vst.msk [vmem:[%s270 + $0x99] sm:$0xff] %vm182, %v251
      %285 = vst.msk [vmem:[%s270 + $0xa9] sm:$0xff] %vm182, %v252
      %286 = vst.msk [vmem:[%s270 + $0xb1] sm:$0xff] %vm182, %v253
      %287 = vst.msk [vmem:[%s270 + $0xc1] sm:$0xff] %vm182, %v254
      %288 = vst.msk [vmem:[%s270 + $0xc9] sm:$0xff] %vm182, %v255
      %289 = vst.msk [vmem:[%s270 + $0xd9] sm:$0xff] %vm182, %v256
      %290 = vst.msk [vmem:[%s270 + $0xe1] sm:$0xff] %vm182, %v257
      %291 = vst.msk [vmem:[%s270 + $0xf1] sm:$0xff] %vm182, %v258
      %292 = vst.msk [vmem:[%s270 + $0xf9] sm:$0xff] %vm182, %v259
      %293 = vst.msk [vmem:[%s270 + $0x109] sm:$0xff] %vm182, %v260
      %294 = vst.msk [vmem:[%s270 + $0x111] sm:$0xff] %vm182, %v261
      %295 = vst.msk [vmem:[%s270 + $0x121] sm:$0xff] %vm182, %v262
      %296 = vst.msk [vmem:[%s270 + $0x129] sm:$0xff] %vm182, %v263
      %297 = vst.msk [vmem:[%s270 + $0x139] sm:$0xff] %vm182, %v264
      %298 = vst.msk [vmem:[%s270 + $0x141] sm:$0xff] %vm182, %v265
      %299 = vst.msk [vmem:[%s270 + $0x151] sm:$0xff] %vm182, %v266
      %300 = vst.msk [vmem:[%s270 + $0x159] sm:$0xff] %vm182, %v267
      %301 = vst.msk [vmem:[%s270 + $0x169] sm:$0xff] %vm182, %v268
      %302 = vst.msk [vmem:[%s270 + $0x171] sm:$0xff] %vm182, %v269
      %v303 = vld [vmem:[#allocation2] sm:$0xff]
      %v304 = vld [vmem:[#allocation2 + $0x8] sm:$0xff]
      %v305 = vld [vmem:[#allocation2 + $0x18] sm:$0xff]
      %v306 = vld [vmem:[#allocation2 + $0x20] sm:$0xff]
      %v307 = vld [vmem:[#allocation2 + $0x30] sm:$0xff]
      %v308 = vld [vmem:[#allocation2 + $0x38] sm:$0xff]
      %v309 = vld [vmem:[#allocation2 + $0x48] sm:$0xff]
      %v310 = vld [vmem:[#allocation2 + $0x50] sm:$0xff]
      %v311 = vld [vmem:[#allocation2 + $0x60] sm:$0xff]
      %v312 = vld [vmem:[#allocation2 + $0x68] sm:$0xff]
      %v313 = vld [vmem:[#allocation2 + $0x78] sm:$0xff]
      %v314 = vld [vmem:[#allocation2 + $0x80] sm:$0xff]
      %v315 = vld [vmem:[#allocation2 + $0x90] sm:$0xff]
      %v316 = vld [vmem:[#allocation2 + $0x98] sm:$0xff]
      %v317 = vld [vmem:[#allocation2 + $0xa8] sm:$0xff]
      %v318 = vld [vmem:[#allocation2 + $0xb0] sm:$0xff]
      %v319 = vld [vmem:[#allocation2 + $0xc0] sm:$0xff]
      %v320 = vld [vmem:[#allocation2 + $0xc8] sm:$0xff]
      %v321 = vld [vmem:[#allocation2 + $0xd8] sm:$0xff]
      %v322 = vld [vmem:[#allocation2 + $0xe0] sm:$0xff]
      %v323 = vld [vmem:[#allocation2 + $0xf0] sm:$0xff]
      %v324 = vld [vmem:[#allocation2 + $0xf8] sm:$0xff]
      %v325 = vld [vmem:[#allocation2 + $0x108] sm:$0xff]
      %v326 = vld [vmem:[#allocation2 + $0x110] sm:$0xff]
      %v327 = vld [vmem:[#allocation2 + $0x120] sm:$0xff]
      %v328 = vld [vmem:[#allocation2 + $0x128] sm:$0xff]
      %v329 = vld [vmem:[#allocation2 + $0x138] sm:$0xff]
      %v330 = vld [vmem:[#allocation2 + $0x140] sm:$0xff]
      %v331 = vld [vmem:[#allocation2 + $0x150] sm:$0xff]
      %v332 = vld [vmem:[#allocation2 + $0x158] sm:$0xff]
      %v333 = vld [vmem:[#allocation2 + $0x168] sm:$0xff]
      %v334 = vld [vmem:[#allocation2 + $0x170] sm:$0xff]
      %v335 = vld [vmem:[#allocation2 + $0x1] sm:$0xff]
      %v336 = vld [vmem:[#allocation2 + $0x9] sm:$0xff]
      %v337 = vld [vmem:[#allocation2 + $0x19] sm:$0xff]
      %v338 = vld [vmem:[#allocation2 + $0x21] sm:$0xff]
      %v339 = vld [vmem:[#allocation2 + $0x31] sm:$0xff]
      %v340 = vld [vmem:[#allocation2 + $0x39] sm:$0xff]
      %v341 = vld [vmem:[#allocation2 + $0x49] sm:$0xff]
      %v342 = vld [vmem:[#allocation2 + $0x51] sm:$0xff]
      %v343 = vld [vmem:[#allocation2 + $0x61] sm:$0xff]
      %v344 = vld [vmem:[#allocation2 + $0x69] sm:$0xff]
      %v345 = vld [vmem:[#allocation2 + $0x79] sm:$0xff]
      %v346 = vld [vmem:[#allocation2 + $0x81] sm:$0xff]
      %v347 = vld [vmem:[#allocation2 + $0x91] sm:$0xff]
      %v348 = vld [vmem:[#allocation2 + $0x99] sm:$0xff]
      %v349 = vld [vmem:[#allocation2 + $0xa9] sm:$0xff]
      %v350 = vld [vmem:[#allocation2 + $0xb1] sm:$0xff]
      %v351 = vld [vmem:[#allocation2 + $0xc1] sm:$0xff]
      %v352 = vld [vmem:[#allocation2 + $0xc9] sm:$0xff]
      %v353 = vld [vmem:[#allocation2 + $0xd9] sm:$0xff]
      %v354 = vld [vmem:[#allocation2 + $0xe1] sm:$0xff]
      %v355 = vld [vmem:[#allocation2 + $0xf1] sm:$0xff]
      %v356 = vld [vmem:[#allocation2 + $0xf9] sm:$0xff]
      %v357 = vld [vmem:[#allocation2 + $0x109] sm:$0xff]
      %v358 = vld [vmem:[#allocation2 + $0x111] sm:$0xff]
      %v359 = vld [vmem:[#allocation2 + $0x121] sm:$0xff]
      %v360 = vld [vmem:[#allocation2 + $0x129] sm:$0xff]
      %v361 = vld [vmem:[#allocation2 + $0x139] sm:$0xff]
      %v362 = vld [vmem:[#allocation2 + $0x141] sm:$0xff]
      %v363 = vld [vmem:[#allocation2 + $0x151] sm:$0xff]
      %v364 = vld [vmem:[#allocation2 + $0x159] sm:$0xff]
      %v365 = vld [vmem:[#allocation2 + $0x169] sm:$0xff]
      %v366 = vld [vmem:[#allocation2 + $0x171] sm:$0xff]
      %v367 = vld [vmem:[#allocation2 + $0x2] sm:$0xff]
      %v368 = vld [vmem:[#allocation2 + $0xa] sm:$0xff]
      %v369 = vld [vmem:[#allocation2 + $0x1a] sm:$0xff]
      %v370 = vld [vmem:[#allocation2 + $0x22] sm:$0xff]
      %v371 = vld [vmem:[#allocation2 + $0x32] sm:$0xff]
      %v372 = vld [vmem:[#allocation2 + $0x3a] sm:$0xff]
      %v373 = vld [vmem:[#allocation2 + $0x4a] sm:$0xff]
      %v374 = vld [vmem:[#allocation2 + $0x52] sm:$0xff]
      %v375 = vld [vmem:[#allocation2 + $0x62] sm:$0xff]
      %v376 = vld [vmem:[#allocation2 + $0x6a] sm:$0xff]
      %v377 = vld [vmem:[#allocation2 + $0x7a] sm:$0xff]
      %v378 = vld [vmem:[#allocation2 + $0x82] sm:$0xff]
      %v379 = vld [vmem:[#allocation2 + $0x92] sm:$0xff]
      %v380 = vld [vmem:[#allocation2 + $0x9a] sm:$0xff]
      %v381 = vld [vmem:[#allocation2 + $0xaa] sm:$0xff]
      %v382 = vld [vmem:[#allocation2 + $0xb2] sm:$0xff]
      %v383 = vld [vmem:[#allocation2 + $0xc2] sm:$0xff]
      %v384 = vld [vmem:[#allocation2 + $0xca] sm:$0xff]
      %v385 = vld [vmem:[#allocation2 + $0xda] sm:$0xff]
      %v386 = vld [vmem:[#allocation2 + $0xe2] sm:$0xff]
      %v387 = vld [vmem:[#allocation2 + $0xf2] sm:$0xff]
      %v388 = vld [vmem:[#allocation2 + $0xfa] sm:$0xff]
      %v389 = vld [vmem:[#allocation2 + $0x10a] sm:$0xff]
      %v390 = vld [vmem:[#allocation2 + $0x112] sm:$0xff]
      %v391 = vld [vmem:[#allocation2 + $0x122] sm:$0xff]
      %v392 = vld [vmem:[#allocation2 + $0x12a] sm:$0xff]
      %v393 = vld [vmem:[#allocation2 + $0x13a] sm:$0xff]
      %v394 = vld [vmem:[#allocation2 + $0x142] sm:$0xff]
      %v395 = vld [vmem:[#allocation2 + $0x152] sm:$0xff]
      %v396 = vld [vmem:[#allocation2 + $0x15a] sm:$0xff]
      %v397 = vld [vmem:[#allocation2 + $0x16a] sm:$0xff]
      %v398 = vld [vmem:[#allocation2 + $0x172] sm:$0xff]
      %v399 = vld [vmem:[%s270] sm:$0xff]
      %v400 = vld [vmem:[%s270 + $0x8] sm:$0xff]
      %v401 = vld [vmem:[%s270 + $0x18] sm:$0xff]
      %v402 = vld [vmem:[%s270 + $0x20] sm:$0xff]
      %v403 = vld [vmem:[%s270 + $0x30] sm:$0xff]
      %v404 = vld [vmem:[%s270 + $0x38] sm:$0xff]
      %v405 = vld [vmem:[%s270 + $0x48] sm:$0xff]
      %v406 = vld [vmem:[%s270 + $0x50] sm:$0xff]
      %v407 = vld [vmem:[%s270 + $0x60] sm:$0xff]
      %v408 = vld [vmem:[%s270 + $0x68] sm:$0xff]
      %v409 = vld [vmem:[%s270 + $0x78] sm:$0xff]
      %v410 = vld [vmem:[%s270 + $0x80] sm:$0xff]
      %v411 = vld [vmem:[%s270 + $0x90] sm:$0xff]
      %v412 = vld [vmem:[%s270 + $0x98] sm:$0xff]
      %v413 = vld [vmem:[%s270 + $0xa8] sm:$0xff]
      %v414 = vld [vmem:[%s270 + $0xb0] sm:$0xff]
      %v415 = vld [vmem:[%s270 + $0xc0] sm:$0xff]
      %v416 = vld [vmem:[%s270 + $0xc8] sm:$0xff]
      %v417 = vld [vmem:[%s270 + $0xd8] sm:$0xff]
      %v418 = vld [vmem:[%s270 + $0xe0] sm:$0xff]
      %v419 = vld [vmem:[%s270 + $0xf0] sm:$0xff]
      %v420 = vld [vmem:[%s270 + $0xf8] sm:$0xff]
      %v421 = vld [vmem:[%s270 + $0x108] sm:$0xff]
      %v422 = vld [vmem:[%s270 + $0x110] sm:$0xff]
      %v423 = vld [vmem:[%s270 + $0x120] sm:$0xff]
      %v424 = vld [vmem:[%s270 + $0x128] sm:$0xff]
      %v425 = vld [vmem:[%s270 + $0x138] sm:$0xff]
      %v426 = vld [vmem:[%s270 + $0x140] sm:$0xff]
      %v427 = vld [vmem:[%s270 + $0x150] sm:$0xff]
      %v428 = vld [vmem:[%s270 + $0x158] sm:$0xff]
      %v429 = vld [vmem:[%s270 + $0x168] sm:$0xff]
      %v430 = vld [vmem:[%s270 + $0x170] sm:$0xff]
      %v431 = vld [vmem:[%s270 + $0x1] sm:$0xff]
      %v432 = vld [vmem:[%s270 + $0x9] sm:$0xff]
      %v433 = vld [vmem:[%s270 + $0x19] sm:$0xff]
      %v434 = vld [vmem:[%s270 + $0x21] sm:$0xff]
      %v435 = vld [vmem:[%s270 + $0x31] sm:$0xff]
      %v436 = vld [vmem:[%s270 + $0x39] sm:$0xff]
      %v437 = vld [vmem:[%s270 + $0x49] sm:$0xff]
      %v438 = vld [vmem:[%s270 + $0x51] sm:$0xff]
      %v439 = vld [vmem:[%s270 + $0x61] sm:$0xff]
      %v440 = vld [vmem:[%s270 + $0x69] sm:$0xff]
      %v441 = vld [vmem:[%s270 + $0x79] sm:$0xff]
      %v442 = vld [vmem:[%s270 + $0x81] sm:$0xff]
      %v443 = vld [vmem:[%s270 + $0x91] sm:$0xff]
      %v444 = vld [vmem:[%s270 + $0x99] sm:$0xff]
      %v445 = vld [vmem:[%s270 + $0xa9] sm:$0xff]
      %v446 = vld [vmem:[%s270 + $0xb1] sm:$0xff]
      %v447 = vld [vmem:[%s270 + $0xc1] sm:$0xff]
      %v448 = vld [vmem:[%s270 + $0xc9] sm:$0xff]
      %v449 = vld [vmem:[%s270 + $0xd9] sm:$0xff]
      %v450 = vld [vmem:[%s270 + $0xe1] sm:$0xff]
      %v451 = vld [vmem:[%s270 + $0xf1] sm:$0xff]
      %v452 = vld [vmem:[%s270 + $0xf9] sm:$0xff]
      %v453 = vld [vmem:[%s270 + $0x109] sm:$0xff]
      %v454 = vld [vmem:[%s270 + $0x111] sm:$0xff]
      %v455 = vld [vmem:[%s270 + $0x121] sm:$0xff]
      %v456 = vld [vmem:[%s270 + $0x129] sm:$0xff]
      %v457 = vld [vmem:[%s270 + $0x139] sm:$0xff]
      %v458 = vld [vmem:[%s270 + $0x141] sm:$0xff]
      %v459 = vld [vmem:[%s270 + $0x151] sm:$0xff]
      %v460 = vld [vmem:[%s270 + $0x159] sm:$0xff]
      %v461 = vld [vmem:[%s270 + $0x169] sm:$0xff]
      %v462 = vld [vmem:[%s270 + $0x171] sm:$0xff]
      %v463 = vld [vmem:[%s270 + $0x2] sm:$0xff]
      %v464 = vld [vmem:[%s270 + $0xa] sm:$0xff]
      %v465 = vld [vmem:[%s270 + $0x1a] sm:$0xff]
      %v466 = vld [vmem:[%s270 + $0x22] sm:$0xff]
      %v467 = vld [vmem:[%s270 + $0x32] sm:$0xff]
      %v468 = vld [vmem:[%s270 + $0x3a] sm:$0xff]
      %v469 = vld [vmem:[%s270 + $0x4a] sm:$0xff]
      %v470 = vld [vmem:[%s270 + $0x52] sm:$0xff]
      %v471 = vld [vmem:[%s270 + $0x62] sm:$0xff]
      %v472 = vld [vmem:[%s270 + $0x6a] sm:$0xff]
      %v473 = vld [vmem:[%s270 + $0x7a] sm:$0xff]
      %v474 = vld [vmem:[%s270 + $0x82] sm:$0xff]
      %v475 = vld [vmem:[%s270 + $0x92] sm:$0xff]
      %v476 = vld [vmem:[%s270 + $0x9a] sm:$0xff]
      %v477 = vld [vmem:[%s270 + $0xaa] sm:$0xff]
      %v478 = vld [vmem:[%s270 + $0xb2] sm:$0xff]
      %v479 = vld [vmem:[%s270 + $0xc2] sm:$0xff]
      %v480 = vld [vmem:[%s270 + $0xca] sm:$0xff]
      %v481 = vld [vmem:[%s270 + $0xda] sm:$0xff]
      %v482 = vld [vmem:[%s270 + $0xe2] sm:$0xff]
      %v483 = vld [vmem:[%s270 + $0xf2] sm:$0xff]
      %v484 = vld [vmem:[%s270 + $0xfa] sm:$0xff]
      %v485 = vld [vmem:[%s270 + $0x10a] sm:$0xff]
      %v486 = vld [vmem:[%s270 + $0x112] sm:$0xff]
      %v487 = vld [vmem:[%s270 + $0x122] sm:$0xff]
      %v488 = vld [vmem:[%s270 + $0x12a] sm:$0xff]
      %v489 = vld [vmem:[%s270 + $0x13a] sm:$0xff]
      %v490 = vld [vmem:[%s270 + $0x142] sm:$0xff]
      %v491 = vld [vmem:[%s270 + $0x152] sm:$0xff]
      %v492 = vld [vmem:[%s270 + $0x15a] sm:$0xff]
      %v493 = vld [vmem:[%s270 + $0x16a] sm:$0xff]
      %v494 = vld [vmem:[%s270 + $0x172] sm:$0xff]
      %s495 = scalar_lea.vmem [#allocation2], 48
      %v496 = vld [vmem:[%s495] sm:$0xff]
      %v497 = vld [vmem:[%s495 + $0x8] sm:$0xff]
      %v498 = vld [vmem:[%s495 + $0x18] sm:$0xff]
      %v499 = vld [vmem:[%s495 + $0x20] sm:$0xff]
      %v500 = vld [vmem:[%s495 + $0x30] sm:$0xff]
      %v501 = vld [vmem:[%s495 + $0x38] sm:$0xff]
      %v502 = vld [vmem:[%s495 + $0x48] sm:$0xff]
      %v503 = vld [vmem:[%s495 + $0x50] sm:$0xff]
      %v504 = vld [vmem:[%s495 + $0x60] sm:$0xff]
      %v505 = vld [vmem:[%s495 + $0x68] sm:$0xff]
      %v506 = vld [vmem:[%s495 + $0x78] sm:$0xff]
      %v507 = vld [vmem:[%s495 + $0x80] sm:$0xff]
      %v508 = vld [vmem:[%s495 + $0x90] sm:$0xff]
      %v509 = vld [vmem:[%s495 + $0x98] sm:$0xff]
      %v510 = vld [vmem:[%s495 + $0xa8] sm:$0xff]
      %v511 = vld [vmem:[%s495 + $0xb0] sm:$0xff]
      %v512 = vld [vmem:[%s495 + $0xc0] sm:$0xff]
      %v513 = vld [vmem:[%s495 + $0xc8] sm:$0xff]
      %v514 = vld [vmem:[%s495 + $0xd8] sm:$0xff]
      %v515 = vld [vmem:[%s495 + $0xe0] sm:$0xff]
      %v516 = vld [vmem:[%s495 + $0xf0] sm:$0xff]
      %v517 = vld [vmem:[%s495 + $0xf8] sm:$0xff]
      %v518 = vld [vmem:[%s495 + $0x108] sm:$0xff]
      %v519 = vld [vmem:[%s495 + $0x110] sm:$0xff]
      %v520 = vld [vmem:[%s495 + $0x120] sm:$0xff]
      %v521 = vld [vmem:[%s495 + $0x128] sm:$0xff]
      %v522 = vld [vmem:[%s495 + $0x138] sm:$0xff]
      %v523 = vld [vmem:[%s495 + $0x140] sm:$0xff]
      %v524 = vld [vmem:[%s495 + $0x150] sm:$0xff]
      %v525 = vld [vmem:[%s495 + $0x158] sm:$0xff]
      %v526 = vld [vmem:[%s495 + $0x168] sm:$0xff]
      %v527 = vld [vmem:[%s495 + $0x170] sm:$0xff]
      %v528 = vld [vmem:[%s495 + $0x1] sm:$0xff]
      %v529 = vld [vmem:[%s495 + $0x9] sm:$0xff]
      %v530 = vld [vmem:[%s495 + $0x19] sm:$0xff]
      %v531 = vld [vmem:[%s495 + $0x21] sm:$0xff]
      %v532 = vld [vmem:[%s495 + $0x31] sm:$0xff]
      %v533 = vld [vmem:[%s495 + $0x39] sm:$0xff]
      %v534 = vld [vmem:[%s495 + $0x49] sm:$0xff]
      %v535 = vld [vmem:[%s495 + $0x51] sm:$0xff]
      %v536 = vld [vmem:[%s495 + $0x61] sm:$0xff]
      %v537 = vld [vmem:[%s495 + $0x69] sm:$0xff]
      %v538 = vld [vmem:[%s495 + $0x79] sm:$0xff]
      %v539 = vld [vmem:[%s495 + $0x81] sm:$0xff]
      %v540 = vld [vmem:[%s495 + $0x91] sm:$0xff]
      %v541 = vld [vmem:[%s495 + $0x99] sm:$0xff]
      %v542 = vld [vmem:[%s495 + $0xa9] sm:$0xff]
      %v543 = vld [vmem:[%s495 + $0xb1] sm:$0xff]
      %v544 = vld [vmem:[%s495 + $0xc1] sm:$0xff]
      %v545 = vld [vmem:[%s495 + $0xc9] sm:$0xff]
      %v546 = vld [vmem:[%s495 + $0xd9] sm:$0xff]
      %v547 = vld [vmem:[%s495 + $0xe1] sm:$0xff]
      %v548 = vld [vmem:[%s495 + $0xf1] sm:$0xff]
      %v549 = vld [vmem:[%s495 + $0xf9] sm:$0xff]
      %v550 = vld [vmem:[%s495 + $0x109] sm:$0xff]
      %v551 = vld [vmem:[%s495 + $0x111] sm:$0xff]
      %v552 = vld [vmem:[%s495 + $0x121] sm:$0xff]
      %v553 = vld [vmem:[%s495 + $0x129] sm:$0xff]
      %v554 = vld [vmem:[%s495 + $0x139] sm:$0xff]
      %v555 = vld [vmem:[%s495 + $0x141] sm:$0xff]
      %v556 = vld [vmem:[%s495 + $0x151] sm:$0xff]
      %v557 = vld [vmem:[%s495 + $0x159] sm:$0xff]
      %v558 = vld [vmem:[%s495 + $0x169] sm:$0xff]
      %v559 = vld [vmem:[%s495 + $0x171] sm:$0xff]
      %v560 = vld [vmem:[%s495 + $0x2] sm:$0xff]
      %v561 = vld [vmem:[%s495 + $0xa] sm:$0xff]
      %v562 = vld [vmem:[%s495 + $0x1a] sm:$0xff]
      %v563 = vld [vmem:[%s495 + $0x22] sm:$0xff]
      %v564 = vld [vmem:[%s495 + $0x32] sm:$0xff]
      %v565 = vld [vmem:[%s495 + $0x3a] sm:$0xff]
      %v566 = vld [vmem:[%s495 + $0x4a] sm:$0xff]
      %v567 = vld [vmem:[%s495 + $0x52] sm:$0xff]
      %v568 = vld [vmem:[%s495 + $0x62] sm:$0xff]
      %v569 = vld [vmem:[%s495 + $0x6a] sm:$0xff]
      %v570 = vld [vmem:[%s495 + $0x7a] sm:$0xff]
      %v571 = vld [vmem:[%s495 + $0x82] sm:$0xff]
      %v572 = vld [vmem:[%s495 + $0x92] sm:$0xff]
      %v573 = vld [vmem:[%s495 + $0x9a] sm:$0xff]
      %v574 = vld [vmem:[%s495 + $0xaa] sm:$0xff]
      %v575 = vld [vmem:[%s495 + $0xb2] sm:$0xff]
      %v576 = vld [vmem:[%s495 + $0xc2] sm:$0xff]
      %v577 = vld [vmem:[%s495 + $0xca] sm:$0xff]
      %v578 = vld [vmem:[%s495 + $0xda] sm:$0xff]
      %v579 = vld [vmem:[%s495 + $0xe2] sm:$0xff]
      %v580 = vld [vmem:[%s495 + $0xf2] sm:$0xff]
      %v581 = vld [vmem:[%s495 + $0xfa] sm:$0xff]
      %v582 = vld [vmem:[%s495 + $0x10a] sm:$0xff]
      %v583 = vld [vmem:[%s495 + $0x112] sm:$0xff]
      %v584 = vld [vmem:[%s495 + $0x122] sm:$0xff]
      %v585 = vld [vmem:[%s495 + $0x12a] sm:$0xff]
      %v586 = vld [vmem:[%s495 + $0x13a] sm:$0xff]
      %v587 = vld [vmem:[%s495 + $0x142] sm:$0xff]
      %v588 = vld [vmem:[%s495 + $0x152] sm:$0xff]
      %v589 = vld [vmem:[%s495 + $0x15a] sm:$0xff]
      %v590 = vld [vmem:[%s495 + $0x16a] sm:$0xff]
      %v591 = vld [vmem:[%s495 + $0x172] sm:$0xff]
      %624 = vrot.lane.b32.xlu0 %v335, 4
      %v625 = vpop.permute.xlu0 %624
      %626 = vrot.lane.b32.xlu0 %v336, 4
      %v627 = vpop.permute.xlu0 %626
      %628 = vrot.lane.b32.xlu0 %v337, 4
      %v629 = vpop.permute.xlu0 %628
      %630 = vrot.lane.b32.xlu0 %v338, 4
      %v631 = vpop.permute.xlu0 %630
      %632 = vrot.lane.b32.xlu0 %v339, 4
      %v633 = vpop.permute.xlu0 %632
      %634 = vrot.lane.b32.xlu0 %v340, 4
      %v635 = vpop.permute.xlu0 %634
      %636 = vrot.lane.b32.xlu0 %v341, 4
      %v637 = vpop.permute.xlu0 %636
      %638 = vrot.lane.b32.xlu0 %v342, 4
      %v639 = vpop.permute.xlu0 %638
      %640 = vrot.lane.b32.xlu0 %v343, 4
      %v641 = vpop.permute.xlu0 %640
      %642 = vrot.lane.b32.xlu0 %v344, 4
      %v643 = vpop.permute.xlu0 %642
      %644 = vrot.lane.b32.xlu0 %v345, 4
      %v645 = vpop.permute.xlu0 %644
      %646 = vrot.lane.b32.xlu0 %v346, 4
      %v647 = vpop.permute.xlu0 %646
      %648 = vrot.lane.b32.xlu0 %v347, 4
      %v649 = vpop.permute.xlu0 %648
      %650 = vrot.lane.b32.xlu0 %v348, 4
      %v651 = vpop.permute.xlu0 %650
      %652 = vrot.lane.b32.xlu0 %v349, 4
      %v653 = vpop.permute.xlu0 %652
      %654 = vrot.lane.b32.xlu0 %v350, 4
      %v655 = vpop.permute.xlu0 %654
      %656 = vrot.lane.b32.xlu0 %v351, 4
      %v657 = vpop.permute.xlu0 %656
      %658 = vrot.lane.b32.xlu0 %v352, 4
      %v659 = vpop.permute.xlu0 %658
      %660 = vrot.lane.b32.xlu0 %v353, 4
      %v661 = vpop.permute.xlu0 %660
      %662 = vrot.lane.b32.xlu0 %v354, 4
      %v663 = vpop.permute.xlu0 %662
      %664 = vrot.lane.b32.xlu0 %v355, 4
      %v665 = vpop.permute.xlu0 %664
      %666 = vrot.lane.b32.xlu0 %v356, 4
      %v667 = vpop.permute.xlu0 %666
      %668 = vrot.lane.b32.xlu0 %v357, 4
      %v669 = vpop.permute.xlu0 %668
      %670 = vrot.lane.b32.xlu0 %v358, 4
      %v671 = vpop.permute.xlu0 %670
      %672 = vrot.lane.b32.xlu0 %v359, 4
      %v673 = vpop.permute.xlu0 %672
      %674 = vrot.lane.b32.xlu0 %v360, 4
      %v675 = vpop.permute.xlu0 %674
      %676 = vrot.lane.b32.xlu0 %v361, 4
      %v677 = vpop.permute.xlu0 %676
      %678 = vrot.lane.b32.xlu0 %v362, 4
      %v679 = vpop.permute.xlu0 %678
      %680 = vrot.lane.b32.xlu0 %v363, 4
      %v681 = vpop.permute.xlu0 %680
      %682 = vrot.lane.b32.xlu0 %v364, 4
      %v683 = vpop.permute.xlu0 %682
      %684 = vrot.lane.b32.xlu0 %v365, 4
      %v685 = vpop.permute.xlu0 %684
      %686 = vrot.lane.b32.xlu0 %v366, 4
      %v687 = vpop.permute.xlu0 %686
      %752 = vrot.lane.b32.xlu0 %v367, 8
      %v753 = vpop.permute.xlu0 %752
      %754 = vrot.lane.b32.xlu0 %v368, 8
      %v755 = vpop.permute.xlu0 %754
      %756 = vrot.lane.b32.xlu0 %v369, 8
      %v757 = vpop.permute.xlu0 %756
      %758 = vrot.lane.b32.xlu0 %v370, 8
      %v759 = vpop.permute.xlu0 %758
      %760 = vrot.lane.b32.xlu0 %v371, 8
      %v761 = vpop.permute.xlu0 %760
      %762 = vrot.lane.b32.xlu0 %v372, 8
      %v763 = vpop.permute.xlu0 %762
      %764 = vrot.lane.b32.xlu0 %v373, 8
      %v765 = vpop.permute.xlu0 %764
      %766 = vrot.lane.b32.xlu0 %v374, 8
      %v767 = vpop.permute.xlu0 %766
      %768 = vrot.lane.b32.xlu0 %v375, 8
      %v769 = vpop.permute.xlu0 %768
      %770 = vrot.lane.b32.xlu0 %v376, 8
      %v771 = vpop.permute.xlu0 %770
      %772 = vrot.lane.b32.xlu0 %v377, 8
      %v773 = vpop.permute.xlu0 %772
      %774 = vrot.lane.b32.xlu0 %v378, 8
      %v775 = vpop.permute.xlu0 %774
      %776 = vrot.lane.b32.xlu0 %v379, 8
      %v777 = vpop.permute.xlu0 %776
      %778 = vrot.lane.b32.xlu0 %v380, 8
      %v779 = vpop.permute.xlu0 %778
      %780 = vrot.lane.b32.xlu0 %v381, 8
      %v781 = vpop.permute.xlu0 %780
      %782 = vrot.lane.b32.xlu0 %v382, 8
      %v783 = vpop.permute.xlu0 %782
      %784 = vrot.lane.b32.xlu0 %v383, 8
      %v785 = vpop.permute.xlu0 %784
      %786 = vrot.lane.b32.xlu0 %v384, 8
      %v787 = vpop.permute.xlu0 %786
      %788 = vrot.lane.b32.xlu0 %v385, 8
      %v789 = vpop.permute.xlu0 %788
      %790 = vrot.lane.b32.xlu0 %v386, 8
      %v791 = vpop.permute.xlu0 %790
      %792 = vrot.lane.b32.xlu0 %v387, 8
      %v793 = vpop.permute.xlu0 %792
      %794 = vrot.lane.b32.xlu0 %v388, 8
      %v795 = vpop.permute.xlu0 %794
      %796 = vrot.lane.b32.xlu0 %v389, 8
      %v797 = vpop.permute.xlu0 %796
      %798 = vrot.lane.b32.xlu0 %v390, 8
      %v799 = vpop.permute.xlu0 %798
      %800 = vrot.lane.b32.xlu0 %v391, 8
      %v801 = vpop.permute.xlu0 %800
      %802 = vrot.lane.b32.xlu0 %v392, 8
      %v803 = vpop.permute.xlu0 %802
      %804 = vrot.lane.b32.xlu0 %v393, 8
      %v805 = vpop.permute.xlu0 %804
      %806 = vrot.lane.b32.xlu0 %v394, 8
      %v807 = vpop.permute.xlu0 %806
      %808 = vrot.lane.b32.xlu0 %v395, 8
      %v809 = vpop.permute.xlu0 %808
      %810 = vrot.lane.b32.xlu0 %v396, 8
      %v811 = vpop.permute.xlu0 %810
      %812 = vrot.lane.b32.xlu0 %v397, 8
      %v813 = vpop.permute.xlu0 %812
      %814 = vrot.lane.b32.xlu0 %v398, 8
      %v815 = vpop.permute.xlu0 %814
      %880 = vrot.lane.b32.xlu0 %v399, 12
      %v881 = vpop.permute.xlu0 %880
      %882 = vrot.lane.b32.xlu0 %v400, 12
      %v883 = vpop.permute.xlu0 %882
      %884 = vrot.lane.b32.xlu0 %v401, 12
      %v885 = vpop.permute.xlu0 %884
      %886 = vrot.lane.b32.xlu0 %v402, 12
      %v887 = vpop.permute.xlu0 %886
      %888 = vrot.lane.b32.xlu0 %v403, 12
      %v889 = vpop.permute.xlu0 %888
      %890 = vrot.lane.b32.xlu0 %v404, 12
      %v891 = vpop.permute.xlu0 %890
      %892 = vrot.lane.b32.xlu0 %v405, 12
      %v893 = vpop.permute.xlu0 %892
      %894 = vrot.lane.b32.xlu0 %v406, 12
      %v895 = vpop.permute.xlu0 %894
      %896 = vrot.lane.b32.xlu0 %v407, 12
      %v897 = vpop.permute.xlu0 %896
      %898 = vrot.lane.b32.xlu0 %v408, 12
      %v899 = vpop.permute.xlu0 %898
      %900 = vrot.lane.b32.xlu0 %v409, 12
      %v901 = vpop.permute.xlu0 %900
      %902 = vrot.lane.b32.xlu0 %v410, 12
      %v903 = vpop.permute.xlu0 %902
      %904 = vrot.lane.b32.xlu0 %v411, 12
      %v905 = vpop.permute.xlu0 %904
      %906 = vrot.lane.b32.xlu0 %v412, 12
      %v907 = vpop.permute.xlu0 %906
      %908 = vrot.lane.b32.xlu0 %v413, 12
      %v909 = vpop.permute.xlu0 %908
      %910 = vrot.lane.b32.xlu0 %v414, 12
      %v911 = vpop.permute.xlu0 %910
      %912 = vrot.lane.b32.xlu0 %v415, 12
      %v913 = vpop.permute.xlu0 %912
      %914 = vrot.lane.b32.xlu0 %v416, 12
      %v915 = vpop.permute.xlu0 %914
      %916 = vrot.lane.b32.xlu0 %v417, 12
      %v917 = vpop.permute.xlu0 %916
      %918 = vrot.lane.b32.xlu0 %v418, 12
      %v919 = vpop.permute.xlu0 %918
      %920 = vrot.lane.b32.xlu0 %v419, 12
      %v921 = vpop.permute.xlu0 %920
      %922 = vrot.lane.b32.xlu0 %v420, 12
      %v923 = vpop.permute.xlu0 %922
      %924 = vrot.lane.b32.xlu0 %v421, 12
      %v925 = vpop.permute.xlu0 %924
      %926 = vrot.lane.b32.xlu0 %v422, 12
      %v927 = vpop.permute.xlu0 %926
      %928 = vrot.lane.b32.xlu0 %v423, 12
      %v929 = vpop.permute.xlu0 %928
      %930 = vrot.lane.b32.xlu0 %v424, 12
      %v931 = vpop.permute.xlu0 %930
      %932 = vrot.lane.b32.xlu0 %v425, 12
      %v933 = vpop.permute.xlu0 %932
      %934 = vrot.lane.b32.xlu0 %v426, 12
      %v935 = vpop.permute.xlu0 %934
      %936 = vrot.lane.b32.xlu0 %v427, 12
      %v937 = vpop.permute.xlu0 %936
      %938 = vrot.lane.b32.xlu0 %v428, 12
      %v939 = vpop.permute.xlu0 %938
      %940 = vrot.lane.b32.xlu0 %v429, 12
      %v941 = vpop.permute.xlu0 %940
      %942 = vrot.lane.b32.xlu0 %v430, 12
      %v943 = vpop.permute.xlu0 %942
      %1008 = vrot.lane.b32.xlu0 %v431, 16
      %v1009 = vpop.permute.xlu0 %1008
      %1010 = vrot.lane.b32.xlu0 %v432, 16
      %v1011 = vpop.permute.xlu0 %1010
      %1012 = vrot.lane.b32.xlu0 %v433, 16
      %v1013 = vpop.permute.xlu0 %1012
      %1014 = vrot.lane.b32.xlu0 %v434, 16
      %v1015 = vpop.permute.xlu0 %1014
      %1016 = vrot.lane.b32.xlu0 %v435, 16
      %v1017 = vpop.permute.xlu0 %1016
      %1018 = vrot.lane.b32.xlu0 %v436, 16
      %v1019 = vpop.permute.xlu0 %1018
      %1020 = vrot.lane.b32.xlu0 %v437, 16
      %v1021 = vpop.permute.xlu0 %1020
      %1022 = vrot.lane.b32.xlu0 %v438, 16
      %v1023 = vpop.permute.xlu0 %1022
      %1024 = vrot.lane.b32.xlu0 %v439, 16
      %v1025 = vpop.permute.xlu0 %1024
      %1026 = vrot.lane.b32.xlu0 %v440, 16
      %v1027 = vpop.permute.xlu0 %1026
      %1028 = vrot.lane.b32.xlu0 %v441, 16
      %v1029 = vpop.permute.xlu0 %1028
      %1030 = vrot.lane.b32.xlu0 %v442, 16
      %v1031 = vpop.permute.xlu0 %1030
      %1032 = vrot.lane.b32.xlu0 %v443, 16
      %v1033 = vpop.permute.xlu0 %1032
      %1034 = vrot.lane.b32.xlu0 %v444, 16
      %v1035 = vpop.permute.xlu0 %1034
      %1036 = vrot.lane.b32.xlu0 %v445, 16
      %v1037 = vpop.permute.xlu0 %1036
      %1038 = vrot.lane.b32.xlu0 %v446, 16
      %v1039 = vpop.permute.xlu0 %1038
      %1040 = vrot.lane.b32.xlu0 %v447, 16
      %v1041 = vpop.permute.xlu0 %1040
      %1042 = vrot.lane.b32.xlu0 %v448, 16
      %v1043 = vpop.permute.xlu0 %1042
      %1044 = vrot.lane.b32.xlu0 %v449, 16
      %v1045 = vpop.permute.xlu0 %1044
      %1046 = vrot.lane.b32.xlu0 %v450, 16
      %v1047 = vpop.permute.xlu0 %1046
      %1048 = vrot.lane.b32.xlu0 %v451, 16
      %v1049 = vpop.permute.xlu0 %1048
      %1050 = vrot.lane.b32.xlu0 %v452, 16
      %v1051 = vpop.permute.xlu0 %1050
      %1052 = vrot.lane.b32.xlu0 %v453, 16
      %v1053 = vpop.permute.xlu0 %1052
      %1054 = vrot.lane.b32.xlu0 %v454, 16
      %v1055 = vpop.permute.xlu0 %1054
      %1056 = vrot.lane.b32.xlu0 %v455, 16
      %v1057 = vpop.permute.xlu0 %1056
      %1058 = vrot.lane.b32.xlu0 %v456, 16
      %v1059 = vpop.permute.xlu0 %1058
      %1060 = vrot.lane.b32.xlu0 %v457, 16
      %v1061 = vpop.permute.xlu0 %1060
      %1062 = vrot.lane.b32.xlu0 %v458, 16
      %v1063 = vpop.permute.xlu0 %1062
      %1064 = vrot.lane.b32.xlu0 %v459, 16
      %v1065 = vpop.permute.xlu0 %1064
      %1066 = vrot.lane.b32.xlu0 %v460, 16
      %v1067 = vpop.permute.xlu0 %1066
      %1068 = vrot.lane.b32.xlu0 %v461, 16
      %v1069 = vpop.permute.xlu0 %1068
      %1070 = vrot.lane.b32.xlu0 %v462, 16
      %v1071 = vpop.permute.xlu0 %1070
      %1136 = vrot.lane.b32.xlu0 %v463, 20
      %v1137 = vpop.permute.xlu0 %1136
      %1138 = vrot.lane.b32.xlu0 %v464, 20
      %v1139 = vpop.permute.xlu0 %1138
      %1140 = vrot.lane.b32.xlu0 %v465, 20
      %v1141 = vpop.permute.xlu0 %1140
      %1142 = vrot.lane.b32.xlu0 %v466, 20
      %v1143 = vpop.permute.xlu0 %1142
      %1144 = vrot.lane.b32.xlu0 %v467, 20
      %v1145 = vpop.permute.xlu0 %1144
      %1146 = vrot.lane.b32.xlu0 %v468, 20
      %v1147 = vpop.permute.xlu0 %1146
      %1148 = vrot.lane.b32.xlu0 %v469, 20
      %v1149 = vpop.permute.xlu0 %1148
      %1150 = vrot.lane.b32.xlu0 %v470, 20
      %v1151 = vpop.permute.xlu0 %1150
      %1152 = vrot.lane.b32.xlu0 %v471, 20
      %v1153 = vpop.permute.xlu0 %1152
      %1154 = vrot.lane.b32.xlu0 %v472, 20
      %v1155 = vpop.permute.xlu0 %1154
      %1156 = vrot.lane.b32.xlu0 %v473, 20
      %v1157 = vpop.permute.xlu0 %1156
      %1158 = vrot.lane.b32.xlu0 %v474, 20
      %v1159 = vpop.permute.xlu0 %1158
      %1160 = vrot.lane.b32.xlu0 %v475, 20
      %v1161 = vpop.permute.xlu0 %1160
      %1162 = vrot.lane.b32.xlu0 %v476, 20
      %v1163 = vpop.permute.xlu0 %1162
      %1164 = vrot.lane.b32.xlu0 %v477, 20
      %v1165 = vpop.permute.xlu0 %1164
      %1166 = vrot.lane.b32.xlu0 %v478, 20
      %v1167 = vpop.permute.xlu0 %1166
      %1168 = vrot.lane.b32.xlu0 %v479, 20
      %v1169 = vpop.permute.xlu0 %1168
      %1170 = vrot.lane.b32.xlu0 %v480, 20
      %v1171 = vpop.permute.xlu0 %1170
      %1172 = vrot.lane.b32.xlu0 %v481, 20
      %v1173 = vpop.permute.xlu0 %1172
      %1174 = vrot.lane.b32.xlu0 %v482, 20
      %v1175 = vpop.permute.xlu0 %1174
      %1176 = vrot.lane.b32.xlu0 %v483, 20
      %v1177 = vpop.permute.xlu0 %1176
      %1178 = vrot.lane.b32.xlu0 %v484, 20
      %v1179 = vpop.permute.xlu0 %1178
      %1180 = vrot.lane.b32.xlu0 %v485, 20
      %v1181 = vpop.permute.xlu0 %1180
      %1182 = vrot.lane.b32.xlu0 %v486, 20
      %v1183 = vpop.permute.xlu0 %1182
      %1184 = vrot.lane.b32.xlu0 %v487, 20
      %v1185 = vpop.permute.xlu0 %1184
      %1186 = vrot.lane.b32.xlu0 %v488, 20
      %v1187 = vpop.permute.xlu0 %1186
      %1188 = vrot.lane.b32.xlu0 %v489, 20
      %v1189 = vpop.permute.xlu0 %1188
      %1190 = vrot.lane.b32.xlu0 %v490, 20
      %v1191 = vpop.permute.xlu0 %1190
      %1192 = vrot.lane.b32.xlu0 %v491, 20
      %v1193 = vpop.permute.xlu0 %1192
      %1194 = vrot.lane.b32.xlu0 %v492, 20
      %v1195 = vpop.permute.xlu0 %1194
      %1196 = vrot.lane.b32.xlu0 %v493, 20
      %v1197 = vpop.permute.xlu0 %1196
      %1198 = vrot.lane.b32.xlu0 %v494, 20
      %v1199 = vpop.permute.xlu0 %1198
      %1264 = vrot.lane.b32.xlu0 %v496, 24
      %v1265 = vpop.permute.xlu0 %1264
      %1266 = vrot.lane.b32.xlu0 %v497, 24
      %v1267 = vpop.permute.xlu0 %1266
      %1268 = vrot.lane.b32.xlu0 %v498, 24
      %v1269 = vpop.permute.xlu0 %1268
      %1270 = vrot.lane.b32.xlu0 %v499, 24
      %v1271 = vpop.permute.xlu0 %1270
      %1272 = vrot.lane.b32.xlu0 %v500, 24
      %v1273 = vpop.permute.xlu0 %1272
      %1274 = vrot.lane.b32.xlu0 %v501, 24
      %v1275 = vpop.permute.xlu0 %1274
      %1276 = vrot.lane.b32.xlu0 %v502, 24
      %v1277 = vpop.permute.xlu0 %1276
      %1278 = vrot.lane.b32.xlu0 %v503, 24
      %v1279 = vpop.permute.xlu0 %1278
      %1280 = vrot.lane.b32.xlu0 %v504, 24
      %v1281 = vpop.permute.xlu0 %1280
      %1282 = vrot.lane.b32.xlu0 %v505, 24
      %v1283 = vpop.permute.xlu0 %1282
      %1284 = vrot.lane.b32.xlu0 %v506, 24
      %v1285 = vpop.permute.xlu0 %1284
      %1286 = vrot.lane.b32.xlu0 %v507, 24
      %v1287 = vpop.permute.xlu0 %1286
      %1288 = vrot.lane.b32.xlu0 %v508, 24
      %v1289 = vpop.permute.xlu0 %1288
      %1290 = vrot.lane.b32.xlu0 %v509, 24
      %v1291 = vpop.permute.xlu0 %1290
      %1292 = vrot.lane.b32.xlu0 %v510, 24
      %v1293 = vpop.permute.xlu0 %1292
      %1294 = vrot.lane.b32.xlu0 %v511, 24
      %v1295 = vpop.permute.xlu0 %1294
      %1296 = vrot.lane.b32.xlu0 %v512, 24
      %v1297 = vpop.permute.xlu0 %1296
      %1298 = vrot.lane.b32.xlu0 %v513, 24
      %v1299 = vpop.permute.xlu0 %1298
      %1300 = vrot.lane.b32.xlu0 %v514, 24
      %v1301 = vpop.permute.xlu0 %1300
      %1302 = vrot.lane.b32.xlu0 %v515, 24
      %v1303 = vpop.permute.xlu0 %1302
      %1304 = vrot.lane.b32.xlu0 %v516, 24
      %v1305 = vpop.permute.xlu0 %1304
      %1306 = vrot.lane.b32.xlu0 %v517, 24
      %v1307 = vpop.permute.xlu0 %1306
      %1308 = vrot.lane.b32.xlu0 %v518, 24
      %v1309 = vpop.permute.xlu0 %1308
      %1310 = vrot.lane.b32.xlu0 %v519, 24
      %v1311 = vpop.permute.xlu0 %1310
      %1312 = vrot.lane.b32.xlu0 %v520, 24
      %v1313 = vpop.permute.xlu0 %1312
      %1314 = vrot.lane.b32.xlu0 %v521, 24
      %v1315 = vpop.permute.xlu0 %1314
      %1316 = vrot.lane.b32.xlu0 %v522, 24
      %v1317 = vpop.permute.xlu0 %1316
      %1318 = vrot.lane.b32.xlu0 %v523, 24
      %v1319 = vpop.permute.xlu0 %1318
      %1320 = vrot.lane.b32.xlu0 %v524, 24
      %v1321 = vpop.permute.xlu0 %1320
      %1322 = vrot.lane.b32.xlu0 %v525, 24
      %v1323 = vpop.permute.xlu0 %1322
      %1324 = vrot.lane.b32.xlu0 %v526, 24
      %v1325 = vpop.permute.xlu0 %1324
      %1326 = vrot.lane.b32.xlu0 %v527, 24
      %v1327 = vpop.permute.xlu0 %1326
      %1392 = vrot.lane.b32.xlu0 %v528, 28
      %v1393 = vpop.permute.xlu0 %1392
      %1394 = vrot.lane.b32.xlu0 %v529, 28
      %v1395 = vpop.permute.xlu0 %1394
      %1396 = vrot.lane.b32.xlu0 %v530, 28
      %v1397 = vpop.permute.xlu0 %1396
      %1398 = vrot.lane.b32.xlu0 %v531, 28
      %v1399 = vpop.permute.xlu0 %1398
      %1400 = vrot.lane.b32.xlu0 %v532, 28
      %v1401 = vpop.permute.xlu0 %1400
      %1402 = vrot.lane.b32.xlu0 %v533, 28
      %v1403 = vpop.permute.xlu0 %1402
      %1404 = vrot.lane.b32.xlu0 %v534, 28
      %v1405 = vpop.permute.xlu0 %1404
      %1406 = vrot.lane.b32.xlu0 %v535, 28
      %v1407 = vpop.permute.xlu0 %1406
      %1408 = vrot.lane.b32.xlu0 %v536, 28
      %v1409 = vpop.permute.xlu0 %1408
      %1410 = vrot.lane.b32.xlu0 %v537, 28
      %v1411 = vpop.permute.xlu0 %1410
      %1412 = vrot.lane.b32.xlu0 %v538, 28
      %v1413 = vpop.permute.xlu0 %1412
      %1414 = vrot.lane.b32.xlu0 %v539, 28
      %v1415 = vpop.permute.xlu0 %1414
      %1416 = vrot.lane.b32.xlu0 %v540, 28
      %v1417 = vpop.permute.xlu0 %1416
      %1418 = vrot.lane.b32.xlu0 %v541, 28
      %v1419 = vpop.permute.xlu0 %1418
      %1420 = vrot.lane.b32.xlu0 %v542, 28
      %v1421 = vpop.permute.xlu0 %1420
      %1422 = vrot.lane.b32.xlu0 %v543, 28
      %v1423 = vpop.permute.xlu0 %1422
      %1424 = vrot.lane.b32.xlu0 %v544, 28
      %v1425 = vpop.permute.xlu0 %1424
      %1426 = vrot.lane.b32.xlu0 %v545, 28
      %v1427 = vpop.permute.xlu0 %1426
      %1428 = vrot.lane.b32.xlu0 %v546, 28
      %v1429 = vpop.permute.xlu0 %1428
      %1430 = vrot.lane.b32.xlu0 %v547, 28
      %v1431 = vpop.permute.xlu0 %1430
      %1432 = vrot.lane.b32.xlu0 %v548, 28
      %v1433 = vpop.permute.xlu0 %1432
      %1434 = vrot.lane.b32.xlu0 %v549, 28
      %v1435 = vpop.permute.xlu0 %1434
      %1436 = vrot.lane.b32.xlu0 %v550, 28
      %v1437 = vpop.permute.xlu0 %1436
      %1438 = vrot.lane.b32.xlu0 %v551, 28
      %v1439 = vpop.permute.xlu0 %1438
      %1440 = vrot.lane.b32.xlu0 %v552, 28
      %v1441 = vpop.permute.xlu0 %1440
      %1442 = vrot.lane.b32.xlu0 %v553, 28
      %v1443 = vpop.permute.xlu0 %1442
      %1444 = vrot.lane.b32.xlu0 %v554, 28
      %v1445 = vpop.permute.xlu0 %1444
      %1446 = vrot.lane.b32.xlu0 %v555, 28
      %v1447 = vpop.permute.xlu0 %1446
      %1448 = vrot.lane.b32.xlu0 %v556, 28
      %v1449 = vpop.permute.xlu0 %1448
      %1450 = vrot.lane.b32.xlu0 %v557, 28
      %v1451 = vpop.permute.xlu0 %1450
      %1452 = vrot.lane.b32.xlu0 %v558, 28
      %v1453 = vpop.permute.xlu0 %1452
      %1454 = vrot.lane.b32.xlu0 %v559, 28
      %v1455 = vpop.permute.xlu0 %1454
      %1520 = vrot.lane.b32.xlu0 %v560, 32
      %v1521 = vpop.permute.xlu0 %1520
      %1522 = vrot.lane.b32.xlu0 %v561, 32
      %v1523 = vpop.permute.xlu0 %1522
      %1524 = vrot.lane.b32.xlu0 %v562, 32
      %v1525 = vpop.permute.xlu0 %1524
      %1526 = vrot.lane.b32.xlu0 %v563, 32
      %v1527 = vpop.permute.xlu0 %1526
      %1528 = vrot.lane.b32.xlu0 %v564, 32
      %v1529 = vpop.permute.xlu0 %1528
      %1530 = vrot.lane.b32.xlu0 %v565, 32
      %v1531 = vpop.permute.xlu0 %1530
      %1532 = vrot.lane.b32.xlu0 %v566, 32
      %v1533 = vpop.permute.xlu0 %1532
      %1534 = vrot.lane.b32.xlu0 %v567, 32
      %v1535 = vpop.permute.xlu0 %1534
      %1536 = vrot.lane.b32.xlu0 %v568, 32
      %v1537 = vpop.permute.xlu0 %1536
      %1538 = vrot.lane.b32.xlu0 %v569, 32
      %v1539 = vpop.permute.xlu0 %1538
      %1540 = vrot.lane.b32.xlu0 %v570, 32
      %v1541 = vpop.permute.xlu0 %1540
      %1542 = vrot.lane.b32.xlu0 %v571, 32
      %v1543 = vpop.permute.xlu0 %1542
      %1544 = vrot.lane.b32.xlu0 %v572, 32
      %v1545 = vpop.permute.xlu0 %1544
      %1546 = vrot.lane.b32.xlu0 %v573, 32
      %v1547 = vpop.permute.xlu0 %1546
      %1548 = vrot.lane.b32.xlu0 %v574, 32
      %v1549 = vpop.permute.xlu0 %1548
      %1550 = vrot.lane.b32.xlu0 %v575, 32
      %v1551 = vpop.permute.xlu0 %1550
      %1552 = vrot.lane.b32.xlu0 %v576, 32
      %v1553 = vpop.permute.xlu0 %1552
      %1554 = vrot.lane.b32.xlu0 %v577, 32
      %v1555 = vpop.permute.xlu0 %1554
      %1556 = vrot.lane.b32.xlu0 %v578, 32
      %v1557 = vpop.permute.xlu0 %1556
      %1558 = vrot.lane.b32.xlu0 %v579, 32
      %v1559 = vpop.permute.xlu0 %1558
      %1560 = vrot.lane.b32.xlu0 %v580, 32
      %v1561 = vpop.permute.xlu0 %1560
      %1562 = vrot.lane.b32.xlu0 %v581, 32
      %v1563 = vpop.permute.xlu0 %1562
      %1564 = vrot.lane.b32.xlu0 %v582, 32
      %v1565 = vpop.permute.xlu0 %1564
      %1566 = vrot.lane.b32.xlu0 %v583, 32
      %v1567 = vpop.permute.xlu0 %1566
      %1568 = vrot.lane.b32.xlu0 %v584, 32
      %v1569 = vpop.permute.xlu0 %1568
      %1570 = vrot.lane.b32.xlu0 %v585, 32
      %v1571 = vpop.permute.xlu0 %1570
      %1572 = vrot.lane.b32.xlu0 %v586, 32
      %v1573 = vpop.permute.xlu0 %1572
      %1574 = vrot.lane.b32.xlu0 %v587, 32
      %v1575 = vpop.permute.xlu0 %1574
      %1576 = vrot.lane.b32.xlu0 %v588, 32
      %v1577 = vpop.permute.xlu0 %1576
      %1578 = vrot.lane.b32.xlu0 %v589, 32
      %v1579 = vpop.permute.xlu0 %1578
      %1580 = vrot.lane.b32.xlu0 %v590, 32
      %v1581 = vpop.permute.xlu0 %1580
      %1582 = vrot.lane.b32.xlu0 %v591, 32
      %v1583 = vpop.permute.xlu0 %1582
      %v1616 = vsel %vm182, %v303, %v625
      %v1617 = vsel %vm182, %v304, %v627
      %v1618 = vsel %vm182, %v305, %v629
      %v1619 = vsel %vm182, %v306, %v631
      %v1620 = vsel %vm182, %v307, %v633
      %v1621 = vsel %vm182, %v308, %v635
      %v1622 = vsel %vm182, %v309, %v637
      %v1623 = vsel %vm182, %v310, %v639
      %v1624 = vsel %vm182, %v311, %v641
      %v1625 = vsel %vm182, %v312, %v643
      %v1626 = vsel %vm182, %v313, %v645
      %v1627 = vsel %vm182, %v314, %v647
      %v1628 = vsel %vm182, %v315, %v649
      %v1629 = vsel %vm182, %v316, %v651
      %v1630 = vsel %vm182, %v317, %v653
      %v1631 = vsel %vm182, %v318, %v655
      %v1632 = vsel %vm182, %v319, %v657
      %v1633 = vsel %vm182, %v320, %v659
      %v1634 = vsel %vm182, %v321, %v661
      %v1635 = vsel %vm182, %v322, %v663
      %v1636 = vsel %vm182, %v323, %v665
      %v1637 = vsel %vm182, %v324, %v667
      %v1638 = vsel %vm182, %v325, %v669
      %v1639 = vsel %vm182, %v326, %v671
      %v1640 = vsel %vm182, %v327, %v673
      %v1641 = vsel %vm182, %v328, %v675
      %v1642 = vsel %vm182, %v329, %v677
      %v1643 = vsel %vm182, %v330, %v679
      %v1644 = vsel %vm182, %v331, %v681
      %v1645 = vsel %vm182, %v332, %v683
      %v1646 = vsel %vm182, %v333, %v685
      %v1647 = vsel %vm182, %v334, %v687
      %vm1648 = vcmask 64512
      %v1649 = vsel %vm1648, %v1616, %v753
      %v1650 = vsel %vm1648, %v1617, %v755
      %v1651 = vsel %vm1648, %v1618, %v757
      %v1652 = vsel %vm1648, %v1619, %v759
      %v1653 = vsel %vm1648, %v1620, %v761
      %v1654 = vsel %vm1648, %v1621, %v763
      %v1655 = vsel %vm1648, %v1622, %v765
      %v1656 = vsel %vm1648, %v1623, %v767
      %v1657 = vsel %vm1648, %v1624, %v769
      %v1658 = vsel %vm1648, %v1625, %v771
      %v1659 = vsel %vm1648, %v1626, %v773
      %v1660 = vsel %vm1648, %v1627, %v775
      %v1661 = vsel %vm1648, %v1628, %v777
      %v1662 = vsel %vm1648, %v1629, %v779
      %v1663 = vsel %vm1648, %v1630, %v781
      %v1664 = vsel %vm1648, %v1631, %v783
      %v1665 = vsel %vm1648, %v1632, %v785
      %v1666 = vsel %vm1648, %v1633, %v787
      %v1667 = vsel %vm1648, %v1634, %v789
      %v1668 = vsel %vm1648, %v1635, %v791
      %v1669 = vsel %vm1648, %v1636, %v793
      %v1670 = vsel %vm1648, %v1637, %v795
      %v1671 = vsel %vm1648, %v1638, %v797
      %v1672 = vsel %vm1648, %v1639, %v799
      %v1673 = vsel %vm1648, %v1640, %v801
      %v1674 = vsel %vm1648, %v1641, %v803
      %v1675 = vsel %vm1648, %v1642, %v805
      %v1676 = vsel %vm1648, %v1643, %v807
      %v1677 = vsel %vm1648, %v1644, %v809
      %v1678 = vsel %vm1648, %v1645, %v811
      %v1679 = vsel %vm1648, %v1646, %v813
      %v1680 = vsel %vm1648, %v1647, %v815
      %vm1681 = vcmask 97280
      %v1682 = vsel %vm1681, %v1649, %v881
      %v1683 = vsel %vm1681, %v1650, %v883
      %v1684 = vsel %vm1681, %v1651, %v885
      %v1685 = vsel %vm1681, %v1652, %v887
      %v1686 = vsel %vm1681, %v1653, %v889
      %v1687 = vsel %vm1681, %v1654, %v891
      %v1688 = vsel %vm1681, %v1655, %v893
      %v1689 = vsel %vm1681, %v1656, %v895
      %v1690 = vsel %vm1681, %v1657, %v897
      %v1691 = vsel %vm1681, %v1658, %v899
      %v1692 = vsel %vm1681, %v1659, %v901
      %v1693 = vsel %vm1681, %v1660, %v903
      %v1694 = vsel %vm1681, %v1661, %v905
      %v1695 = vsel %vm1681, %v1662, %v907
      %v1696 = vsel %vm1681, %v1663, %v909
      %v1697 = vsel %vm1681, %v1664, %v911
      %v1698 = vsel %vm1681, %v1665, %v913
      %v1699 = vsel %vm1681, %v1666, %v915
      %v1700 = vsel %vm1681, %v1667, %v917
      %v1701 = vsel %vm1681, %v1668, %v919
      %v1702 = vsel %vm1681, %v1669, %v921
      %v1703 = vsel %vm1681, %v1670, %v923
      %v1704 = vsel %vm1681, %v1671, %v925
      %v1705 = vsel %vm1681, %v1672, %v927
      %v1706 = vsel %vm1681, %v1673, %v929
      %v1707 = vsel %vm1681, %v1674, %v931
      %v1708 = vsel %vm1681, %v1675, %v933
      %v1709 = vsel %vm1681, %v1676, %v935
      %v1710 = vsel %vm1681, %v1677, %v937
      %v1711 = vsel %vm1681, %v1678, %v939
      %v1712 = vsel %vm1681, %v1679, %v941
      %v1713 = vsel %vm1681, %v1680, %v943
      %vm1714 = vcmask 130048
      %v1715 = vsel %vm1714, %v1682, %v1009
      %v1716 = vsel %vm1714, %v1683, %v1011
      %v1717 = vsel %vm1714, %v1684, %v1013
      %v1718 = vsel %vm1714, %v1685, %v1015
      %v1719 = vsel %vm1714, %v1686, %v1017
      %v1720 = vsel %vm1714, %v1687, %v1019
      %v1721 = vsel %vm1714, %v1688, %v1021
      %v1722 = vsel %vm1714, %v1689, %v1023
      %v1723 = vsel %vm1714, %v1690, %v1025
      %v1724 = vsel %vm1714, %v1691, %v1027
      %v1725 = vsel %vm1714, %v1692, %v1029
      %v1726 = vsel %vm1714, %v1693, %v1031
      %v1727 = vsel %vm1714, %v1694, %v1033
      %v1728 = vsel %vm1714, %v1695, %v1035
      %v1729 = vsel %vm1714, %v1696, %v1037
      %v1730 = vsel %vm1714, %v1697, %v1039
      %v1731 = vsel %vm1714, %v1698, %v1041
      %v1732 = vsel %vm1714, %v1699, %v1043
      %v1733 = vsel %vm1714, %v1700, %v1045
      %v1734 = vsel %vm1714, %v1701, %v1047
      %v1735 = vsel %vm1714, %v1702, %v1049
      %v1736 = vsel %vm1714, %v1703, %v1051
      %v1737 = vsel %vm1714, %v1704, %v1053
      %v1738 = vsel %vm1714, %v1705, %v1055
      %v1739 = vsel %vm1714, %v1706, %v1057
      %v1740 = vsel %vm1714, %v1707, %v1059
      %v1741 = vsel %vm1714, %v1708, %v1061
      %v1742 = vsel %vm1714, %v1709, %v1063
      %v1743 = vsel %vm1714, %v1710, %v1065
      %v1744 = vsel %vm1714, %v1711, %v1067
      %v1745 = vsel %vm1714, %v1712, %v1069
      %v1746 = vsel %vm1714, %v1713, %v1071
      %vm1747 = vcmask 162816
      %v1748 = vsel %vm1747, %v1715, %v1137
      %v1749 = vsel %vm1747, %v1716, %v1139
      %v1750 = vsel %vm1747, %v1717, %v1141
      %v1751 = vsel %vm1747, %v1718, %v1143
      %v1752 = vsel %vm1747, %v1719, %v1145
      %v1753 = vsel %vm1747, %v1720, %v1147
      %v1754 = vsel %vm1747, %v1721, %v1149
      %v1755 = vsel %vm1747, %v1722, %v1151
      %v1756 = vsel %vm1747, %v1723, %v1153
      %v1757 = vsel %vm1747, %v1724, %v1155
      %v1758 = vsel %vm1747, %v1725, %v1157
      %v1759 = vsel %vm1747, %v1726, %v1159
      %v1760 = vsel %vm1747, %v1727, %v1161
      %v1761 = vsel %vm1747, %v1728, %v1163
      %v1762 = vsel %vm1747, %v1729, %v1165
      %v1763 = vsel %vm1747, %v1730, %v1167
      %v1764 = vsel %vm1747, %v1731, %v1169
      %v1765 = vsel %vm1747, %v1732, %v1171
      %v1766 = vsel %vm1747, %v1733, %v1173
      %v1767 = vsel %vm1747, %v1734, %v1175
      %v1768 = vsel %vm1747, %v1735, %v1177
      %v1769 = vsel %vm1747, %v1736, %v1179
      %v1770 = vsel %vm1747, %v1737, %v1181
      %v1771 = vsel %vm1747, %v1738, %v1183
      %v1772 = vsel %vm1747, %v1739, %v1185
      %v1773 = vsel %vm1747, %v1740, %v1187
      %v1774 = vsel %vm1747, %v1741, %v1189
      %v1775 = vsel %vm1747, %v1742, %v1191
      %v1776 = vsel %vm1747, %v1743, %v1193
      %v1777 = vsel %vm1747, %v1744, %v1195
      %v1778 = vsel %vm1747, %v1745, %v1197
      %v1779 = vsel %vm1747, %v1746, %v1199
      %vm1780 = vcmask 195584
      %v1781 = vsel %vm1780, %v1748, %v1265
      %v1782 = vsel %vm1780, %v1749, %v1267
      %v1783 = vsel %vm1780, %v1750, %v1269
      %v1784 = vsel %vm1780, %v1751, %v1271
      %v1785 = vsel %vm1780, %v1752, %v1273
      %v1786 = vsel %vm1780, %v1753, %v1275
      %v1787 = vsel %vm1780, %v1754, %v1277
      %v1788 = vsel %vm1780, %v1755, %v1279
      %v1789 = vsel %vm1780, %v1756, %v1281
      %v1790 = vsel %vm1780, %v1757, %v1283
      %v1791 = vsel %vm1780, %v1758, %v1285
      %v1792 = vsel %vm1780, %v1759, %v1287
      %v1793 = vsel %vm1780, %v1760, %v1289
      %v1794 = vsel %vm1780, %v1761, %v1291
      %v1795 = vsel %vm1780, %v1762, %v1293
      %v1796 = vsel %vm1780, %v1763, %v1295
      %v1797 = vsel %vm1780, %v1764, %v1297
      %v1798 = vsel %vm1780, %v1765, %v1299
      %v1799 = vsel %vm1780, %v1766, %v1301
      %v1800 = vsel %vm1780, %v1767, %v1303
      %v1801 = vsel %vm1780, %v1768, %v1305
      %v1802 = vsel %vm1780, %v1769, %v1307
      %v1803 = vsel %vm1780, %v1770, %v1309
      %v1804 = vsel %vm1780, %v1771, %v1311
      %v1805 = vsel %vm1780, %v1772, %v1313
      %v1806 = vsel %vm1780, %v1773, %v1315
      %v1807 = vsel %vm1780, %v1774, %v1317
      %v1808 = vsel %vm1780, %v1775, %v1319
      %v1809 = vsel %vm1780, %v1776, %v1321
      %v1810 = vsel %vm1780, %v1777, %v1323
      %v1811 = vsel %vm1780, %v1778, %v1325
      %v1812 = vsel %vm1780, %v1779, %v1327
      %vm1813 = vcmask 228352
      %v1814 = vsel %vm1813, %v1781, %v1393
      %v1815 = vsel %vm1813, %v1782, %v1395
      %v1816 = vsel %vm1813, %v1783, %v1397
      %v1817 = vsel %vm1813, %v1784, %v1399
      %v1818 = vsel %vm1813, %v1785, %v1401
      %v1819 = vsel %vm1813, %v1786, %v1403
      %v1820 = vsel %vm1813, %v1787, %v1405
      %v1821 = vsel %vm1813, %v1788, %v1407
      %v1822 = vsel %vm1813, %v1789, %v1409
      %v1823 = vsel %vm1813, %v1790, %v1411
      %v1824 = vsel %vm1813, %v1791, %v1413
      %v1825 = vsel %vm1813, %v1792, %v1415
      %v1826 = vsel %vm1813, %v1793, %v1417
      %v1827 = vsel %vm1813, %v1794, %v1419
      %v1828 = vsel %vm1813, %v1795, %v1421
      %v1829 = vsel %vm1813, %v1796, %v1423
      %v1830 = vsel %vm1813, %v1797, %v1425
      %v1831 = vsel %vm1813, %v1798, %v1427
      %v1832 = vsel %vm1813, %v1799, %v1429
      %v1833 = vsel %vm1813, %v1800, %v1431
      %v1834 = vsel %vm1813, %v1801, %v1433
      %v1835 = vsel %vm1813, %v1802, %v1435
      %v1836 = vsel %vm1813, %v1803, %v1437
      %v1837 = vsel %vm1813, %v1804, %v1439
      %v1838 = vsel %vm1813, %v1805, %v1441
      %v1839 = vsel %vm1813, %v1806, %v1443
      %v1840 = vsel %vm1813, %v1807, %v1445
      %v1841 = vsel %vm1813, %v1808, %v1447
      %v1842 = vsel %vm1813, %v1809, %v1449
      %v1843 = vsel %vm1813, %v1810, %v1451
      %v1844 = vsel %vm1813, %v1811, %v1453
      %v1845 = vsel %vm1813, %v1812, %v1455
      %vm1846 = vcmask 261120
      %v1847 = vsel %vm1846, %v1814, %v1521
      %v1848 = vsel %vm1846, %v1815, %v1523
      %v1849 = vsel %vm1846, %v1816, %v1525
      %v1850 = vsel %vm1846, %v1817, %v1527
      %v1851 = vsel %vm1846, %v1818, %v1529
      %v1852 = vsel %vm1846, %v1819, %v1531
      %v1853 = vsel %vm1846, %v1820, %v1533
      %v1854 = vsel %vm1846, %v1821, %v1535
      %v1855 = vsel %vm1846, %v1822, %v1537
      %v1856 = vsel %vm1846, %v1823, %v1539
      %v1857 = vsel %vm1846, %v1824, %v1541
      %v1858 = vsel %vm1846, %v1825, %v1543
      %v1859 = vsel %vm1846, %v1826, %v1545
      %v1860 = vsel %vm1846, %v1827, %v1547
      %v1861 = vsel %vm1846, %v1828, %v1549
      %v1862 = vsel %vm1846, %v1829, %v1551
      %v1863 = vsel %vm1846, %v1830, %v1553
      %v1864 = vsel %vm1846, %v1831, %v1555
      %v1865 = vsel %vm1846, %v1832, %v1557
      %v1866 = vsel %vm1846, %v1833, %v1559
      %v1867 = vsel %vm1846, %v1834, %v1561
      %v1868 = vsel %vm1846, %v1835, %v1563
      %v1869 = vsel %vm1846, %v1836, %v1565
      %v1870 = vsel %vm1846, %v1837, %v1567
      %v1871 = vsel %vm1846, %v1838, %v1569
      %v1872 = vsel %vm1846, %v1839, %v1571
      %v1873 = vsel %vm1846, %v1840, %v1573
      %v1874 = vsel %vm1846, %v1841, %v1575
      %v1875 = vsel %vm1846, %v1842, %v1577
      %v1876 = vsel %vm1846, %v1843, %v1579
      %v1877 = vsel %vm1846, %v1844, %v1581
      %v1878 = vsel %vm1846, %v1845, %v1583
      %v1879 = vld [vmem:[%s1] sm:$0xff]
      %v1880 = vld [vmem:[%s1 + $0x8] sm:$0xff]
      %v1881 = vld [vmem:[%s1 + $0x10] sm:$0xff]
      %v1882 = vld [vmem:[%s1 + $0x18] sm:$0xff]
      %v1883 = vld [vmem:[%s1 + $0x20] sm:$0xf]
      %vm1884 = vcmask 293888
      %v1886 = vsel %vm1884, %v1847, 0
      %v1889 = vsel %vm1884, %v1848, 0
      %v1892 = vsel %vm1884, %v1849, 0
      %v1895 = vsel %vm1884, %v1850, 0
      %v1898 = vsel %vm1884, %v1851, 0
      %v1901 = vsel %vm1884, %v1852, 0
      %v1904 = vsel %vm1884, %v1853, 0
      %v1907 = vsel %vm1884, %v1854, 0
      %v1910 = vsel %vm1884, %v1855, 0
      %v1913 = vsel %vm1884, %v1856, 0
      %v1916 = vsel %vm1884, %v1857, 0
      %v1919 = vsel %vm1884, %v1858, 0
      %v1922 = vsel %vm1884, %v1859, 0
      %v1925 = vsel %vm1884, %v1860, 0
      %v1928 = vsel %vm1884, %v1861, 0
      %v1931 = vsel %vm1884, %v1862, 0
      %v1934 = vsel %vm1884, %v1863, 0
      %v1937 = vsel %vm1884, %v1864, 0
      %v1940 = vsel %vm1884, %v1865, 0
      %v1943 = vsel %vm1884, %v1866, 0
      %v1946 = vsel %vm1884, %v1867, 0
      %v1949 = vsel %vm1884, %v1868, 0
      %v1952 = vsel %vm1884, %v1869, 0
      %v1955 = vsel %vm1884, %v1870, 0
      %v1958 = vsel %vm1884, %v1871, 0
      %v1961 = vsel %vm1884, %v1872, 0
      %v1964 = vsel %vm1884, %v1873, 0
      %v1967 = vsel %vm1884, %v1874, 0
      %v1970 = vsel %vm1884, %v1875, 0
      %v1973 = vsel %vm1884, %v1876, 0
      %v1976 = vsel %vm1884, %v1877, 0
      %v1979 = vsel %vm1884, %v1878, 0
      %vm1981 = vcmask 1043456
      %v1983 = vsel %vm1981, %v1883, 0
      %1985 = vmatprep.subr.mxu0 0.0
      %1986 = vmatpush1.msra.mxu0 %v1879
      %1987 = vmatprep.subr.mxu0 0.0
      %1988 = vmatpush1.msra.mxu0 %v1880
      %1989 = vmatprep.subr.mxu0 0.0
      %1990 = vmatpush1.msra.mxu0 %v1881
      %1991 = vmatprep.subr.mxu0 0.0
      %1992 = vmatpush1.msra.mxu0 %v1882
      %1993 = vmatprep.subr.mxu0 0.0
      %1994 = vmatpush1.msra.mxu0 %v1983
      %1995 = vmatprep.subr.mxu0 0.0
      %1996 = vmatpush1.msra.mxu0 0.0
      %1997 = vmatprep.subr.mxu0 0.0
      %1998 = vmatpush1.msra.mxu0 0.0
      %1999 = vmatprep.subr.mxu0 0.0
      %2000 = vmatpush1.msra.mxu0 0.0
      %2001 = vmatprep.subr.mxu0 0.0
      %2002 = vmatpush1.msra.mxu0 0.0
      %2003 = vmatprep.subr.mxu0 0.0
      %2004 = vmatpush1.msra.mxu0 0.0
      %2005 = vmatprep.subr.mxu0 0.0
      %2006 = vmatpush1.msra.mxu0 0.0
      %2007 = vmatprep.subr.mxu0 0.0
      %2008 = vmatpush1.msra.mxu0 0.0
      %2009 = vmatprep.subr.mxu0 0.0
      %2010 = vmatpush1.msra.mxu0 0.0
      %2011 = vmatprep.subr.mxu0 0.0
      %2012 = vmatpush1.msra.mxu0 0.0
      %2013 = vmatprep.subr.mxu0 0.0
      %2014 = vmatpush1.msra.mxu0 0.0
      %2015 = vmatprep.subr.mxu0 0.0
      %2016 = vmatpush1.msra.mxu0 0.0
      %2017 = vmatprep.subr.mxu0 0.0
      %2018 = vmatpush1.msra.mxu0 0.0
      %2019 = vmatprep.subr.mxu0 0.0
      %2020 = vmatpush1.msra.mxu0 0.0
      %2021 = vmatprep.subr.mxu0 0.0
      %2022 = vmatpush1.msra.mxu0 0.0
      %2023 = vmatprep.subr.mxu0 0.0
      %2024 = vmatpush1.msra.mxu0 0.0
      %2025 = vmatprep.subr.mxu0 0.0
      %2026 = vmatpush1.msra.mxu0 0.0
      %2027 = vmatprep.subr.mxu0 0.0
      %2028 = vmatpush1.msra.mxu0 0.0
      %2029 = vmatprep.subr.mxu0 0.0
      %2030 = vmatpush1.msra.mxu0 0.0
      %2031 = vmatprep.subr.mxu0 0.0
      %2032 = vmatpush1.msra.mxu0 0.0
      %2033 = vmatprep.subr.mxu0 0.0
      %2034 = vmatpush1.msra.mxu0 0.0
      %2035 = vmatprep.subr.mxu0 0.0
      %2036 = vmatpush1.msra.mxu0 0.0
      %2037 = vmatprep.subr.mxu0 0.0
      %2038 = vmatpush1.msra.mxu0 0.0
      %2039 = vmatprep.subr.mxu0 0.0
      %2040 = vmatpush1.msra.mxu0 0.0
      %2041 = vmatprep.subr.mxu0 0.0
      %2042 = vmatpush1.msra.mxu0 0.0
      %2043 = vmatprep.subr.mxu0 0.0
      %2044 = vmatpush1.msra.mxu0 0.0
      %2045 = vmatprep.subr.mxu0 0.0
      %2046 = vmatpush1.msra.mxu0 0.0
      %2047 = vmatprep.subr.mxu0 0.0
      %2048 = vmatpush1.msra.mxu0 0.0
      %2049 = vmatprep.mubr.f32.mxu0 0.0
      %2050 = vmatmul.mubr.f32.gmra.mrb[0].mxu0 %v1886
      %v2051 = vpop.f32.mrb[0].mxu0
      %v2052 = vadd.f32 0.0, %v2051
      %v2053 = vpop.f32.mrb[0].mxu0
      %2054 = vmatprep.mubr.f32.mxu0 0.0
      %2055 = vmatmul.mubr.f32.gmra.mrb[0].mxu0 %v1889
      %v2056 = vpop.f32.mrb[0].mxu0
      %v2057 = vadd.f32 0.0, %v2056
      %v2058 = vpop.f32.mrb[0].mxu0
      %2059 = vmatprep.mubr.f32.mxu0 0.0
      %2060 = vmatmul.mubr.f32.gmra.mrb[0].mxu0 %v1892
      %v2061 = vpop.f32.mrb[0].mxu0
      %v2062 = vadd.f32 0.0, %v2061
      %v2063 = vpop.f32.mrb[0].mxu0
      %2064 = vmatprep.mubr.f32.mxu0 0.0
      %2065 = vmatmul.mubr.f32.gmra.mrb[0].mxu0 %v1895
      %v2066 = vpop.f32.mrb[0].mxu0
      %v2067 = vadd.f32 0.0, %v2066
      %v2068 = vpop.f32.mrb[0].mxu0
      %2069 = vmatprep.mubr.f32.mxu0 0.0
      %2070 = vmatmul.mubr.f32.gmra.mrb[0].mxu0 %v1898
      %v2071 = vpop.f32.mrb[0].mxu0
      %v2072 = vadd.f32 0.0, %v2071
      %v2073 = vpop.f32.mrb[0].mxu0
      %2074 = vmatprep.mubr.f32.mxu0 0.0
      %2075 = vmatmul.mubr.f32.gmra.mrb[0].mxu0 %v1901
      %v2076 = vpop.f32.mrb[0].mxu0
      %v2077 = vadd.f32 0.0, %v2076
      %v2078 = vpop.f32.mrb[0].mxu0
      %2079 = vmatprep.mubr.f32.mxu0 0.0
      %2080 = vmatmul.mubr.f32.gmra.mrb[0].mxu0 %v1904
      %v2081 = vpop.f32.mrb[0].mxu0
      %v2082 = vadd.f32 0.0, %v2081
      %v2083 = vpop.f32.mrb[0].mxu0
      %2084 = vmatprep.mubr.f32.mxu0 0.0
      %2085 = vmatmul.mubr.f32.gmra.mrb[0].mxu0 %v1907
      %v2086 = vpop.f32.mrb[0].mxu0
      %v2087 = vadd.f32 0.0, %v2086
      %v2088 = vpop.f32.mrb[0].mxu0
      %2089 = vmatprep.mubr.f32.mxu0 0.0
      %2090 = vmatmul.mubr.f32.gmra.mrb[0].mxu0 %v1910
      %v2091 = vpop.f32.mrb[0].mxu0
      %v2092 = vadd.f32 0.0, %v2091
      %v2093 = vpop.f32.mrb[0].mxu0
      %2094 = vmatprep.mubr.f32.mxu0 0.0
      %2095 = vmatmul.mubr.f32.gmra.mrb[0].mxu0 %v1913
      %v2096 = vpop.f32.mrb[0].mxu0
      %v2097 = vadd.f32 0.0, %v2096
      %v2098 = vpop.f32.mrb[0].mxu0
      %2099 = vmatprep.mubr.f32.mxu0 0.0
      %2100 = vmatmul.mubr.f32.gmra.mrb[0].mxu0 %v1916
      %v2101 = vpop.f32.mrb[0].mxu0
      %v2102 = vadd.f32 0.0, %v2101
      %v2103 = vpop.f32.mrb[0].mxu0
      %2104 = vmatprep.mubr.f32.mxu0 0.0
      %2105 = vmatmul.mubr.f32.gmra.mrb[0].mxu0 %v1919
      %v2106 = vpop.f32.mrb[0].mxu0
      %v2107 = vadd.f32 0.0, %v2106
      %v2108 = vpop.f32.mrb[0].mxu0
      %2109 = vmatprep.mubr.f32.mxu0 0.0
      %2110 = vmatmul.mubr.f32.gmra.mrb[0].mxu0 %v1922
      %v2111 = vpop.f32.mrb[0].mxu0
      %v2112 = vadd.f32 0.0, %v2111
      %v2113 = vpop.f32.mrb[0].mxu0
      %2114 = vmatprep.mubr.f32.mxu0 0.0
      %2115 = vmatmul.mubr.f32.gmra.mrb[0].mxu0 %v1925
      %v2116 = vpop.f32.mrb[0].mxu0
      %v2117 = vadd.f32 0.0, %v2116
      %v2118 = vpop.f32.mrb[0].mxu0
      %2119 = vmatprep.mubr.f32.mxu0 0.0
      %2120 = vmatmul.mubr.f32.gmra.mrb[0].mxu0 %v1928
      %v2121 = vpop.f32.mrb[0].mxu0
      %v2122 = vadd.f32 0.0, %v2121
      %v2123 = vpop.f32.mrb[0].mxu0
      %2124 = vmatprep.mubr.f32.mxu0 0.0
      %2125 = vmatmul.mubr.f32.gmra.mrb[0].mxu0 %v1931
      %v2126 = vpop.f32.mrb[0].mxu0
      %v2127 = vadd.f32 0.0, %v2126
      %v2128 = vpop.f32.mrb[0].mxu0
      %2129 = vmatprep.mubr.f32.mxu0 0.0
      %2130 = vmatmul.mubr.f32.gmra.mrb[0].mxu0 %v1934
      %v2131 = vpop.f32.mrb[0].mxu0
      %v2132 = vadd.f32 0.0, %v2131
      %v2133 = vpop.f32.mrb[0].mxu0
      %2134 = vmatprep.mubr.f32.mxu0 0.0
      %2135 = vmatmul.mubr.f32.gmra.mrb[0].mxu0 %v1937
      %v2136 = vpop.f32.mrb[0].mxu0
      %v2137 = vadd.f32 0.0, %v2136
      %v2138 = vpop.f32.mrb[0].mxu0
      %2139 = vmatprep.mubr.f32.mxu0 0.0
      %2140 = vmatmul.mubr.f32.gmra.mrb[0].mxu0 %v1940
      %v2141 = vpop.f32.mrb[0].mxu0
      %v2142 = vadd.f32 0.0, %v2141
      %v2143 = vpop.f32.mrb[0].mxu0
      %2144 = vmatprep.mubr.f32.mxu0 0.0
      %2145 = vmatmul.mubr.f32.gmra.mrb[0].mxu0 %v1943
      %v2146 = vpop.f32.mrb[0].mxu0
      %v2147 = vadd.f32 0.0, %v2146
      %v2148 = vpop.f32.mrb[0].mxu0
      %2149 = vmatprep.mubr.f32.mxu0 0.0
      %2150 = vmatmul.mubr.f32.gmra.mrb[0].mxu0 %v1946
      %v2151 = vpop.f32.mrb[0].mxu0
      %v2152 = vadd.f32 0.0, %v2151
      %v2153 = vpop.f32.mrb[0].mxu0
      %2154 = vmatprep.mubr.f32.mxu0 0.0
      %2155 = vmatmul.mubr.f32.gmra.mrb[0].mxu0 %v1949
      %v2156 = vpop.f32.mrb[0].mxu0
      %v2157 = vadd.f32 0.0, %v2156
      %v2158 = vpop.f32.mrb[0].mxu0
      %2159 = vmatprep.mubr.f32.mxu0 0.0
      %2160 = vmatmul.mubr.f32.gmra.mrb[0].mxu0 %v1952
      %v2161 = vpop.f32.mrb[0].mxu0
      %v2162 = vadd.f32 0.0, %v2161
      %v2163 = vpop.f32.mrb[0].mxu0
      %2164 = vmatprep.mubr.f32.mxu0 0.0
      %2165 = vmatmul.mubr.f32.gmra.mrb[0].mxu0 %v1955
      %v2166 = vpop.f32.mrb[0].mxu0
      %v2167 = vadd.f32 0.0, %v2166
      %v2168 = vpop.f32.mrb[0].mxu0
      %2169 = vmatprep.mubr.f32.mxu0 0.0
      %2170 = vmatmul.mubr.f32.gmra.mrb[0].mxu0 %v1958
      %v2171 = vpop.f32.mrb[0].mxu0
      %v2172 = vadd.f32 0.0, %v2171
      %v2173 = vpop.f32.mrb[0].mxu0
      %2174 = vmatprep.mubr.f32.mxu0 0.0
      %2175 = vmatmul.mubr.f32.gmra.mrb[0].mxu0 %v1961
      %v2176 = vpop.f32.mrb[0].mxu0
      %v2177 = vadd.f32 0.0, %v2176
      %v2178 = vpop.f32.mrb[0].mxu0
      %2179 = vmatprep.mubr.f32.mxu0 0.0
      %2180 = vmatmul.mubr.f32.gmra.mrb[0].mxu0 %v1964
      %v2181 = vpop.f32.mrb[0].mxu0
      %v2182 = vadd.f32 0.0, %v2181
      %v2183 = vpop.f32.mrb[0].mxu0
      %2184 = vmatprep.mubr.f32.mxu0 0.0
      %2185 = vmatmul.mubr.f32.gmra.mrb[0].mxu0 %v1967
      %v2186 = vpop.f32.mrb[0].mxu0
      %v2187 = vadd.f32 0.0, %v2186
      %v2188 = vpop.f32.mrb[0].mxu0
      %2189 = vmatprep.mubr.f32.mxu0 0.0
      %2190 = vmatmul.mubr.f32.gmra.mrb[0].mxu0 %v1970
      %v2191 = vpop.f32.mrb[0].mxu0
      %v2192 = vadd.f32 0.0, %v2191
      %v2193 = vpop.f32.mrb[0].mxu0
      %2194 = vmatprep.mubr.f32.mxu0 0.0
      %2195 = vmatmul.mubr.f32.gmra.mrb[0].mxu0 %v1973
      %v2196 = vpop.f32.mrb[0].mxu0
      %v2197 = vadd.f32 0.0, %v2196
      %v2198 = vpop.f32.mrb[0].mxu0
      %2199 = vmatprep.mubr.f32.mxu0 0.0
      %2200 = vmatmul.mubr.f32.gmra.mrb[0].mxu0 %v1976
      %v2201 = vpop.f32.mrb[0].mxu0
      %v2202 = vadd.f32 0.0, %v2201
      %v2203 = vpop.f32.mrb[0].mxu0
      %2204 = vmatprep.mubr.f32.mxu0 0.0
      %2205 = vmatmul.mubr.f32.gmra.mrb[0].mxu0 %v1979
      %v2206 = vpop.f32.mrb[0].mxu0
      %v2207 = vadd.f32 0.0, %v2206
      %v2208 = vpop.f32.mrb[0].mxu0
      %2209 = vdwg.mxu0
      %2210 = vst.msk [vmem:[%s177] sm:$0xff] %vm1846, %v2052
      %2211 = vst.msk [vmem:[%s177 + $0x8] sm:$0xff] %vm1846, %v2057
      %2212 = vst.msk [vmem:[%s177 + $0x10] sm:$0xff] %vm1846, %v2062
      %2213 = vst.msk [vmem:[%s177 + $0x18] sm:$0xff] %vm1846, %v2067
      %2214 = vst.msk [vmem:[%s177 + $0x20] sm:$0xff] %vm1846, %v2072
      %2215 = vst.msk [vmem:[%s177 + $0x28] sm:$0xff] %vm1846, %v2077
      %2216 = vst.msk [vmem:[%s177 + $0x30] sm:$0xff] %vm1846, %v2082
      %2217 = vst.msk [vmem:[%s177 + $0x38] sm:$0xff] %vm1846, %v2087
      %2218 = vst.msk [vmem:[%s177 + $0x40] sm:$0xff] %vm1846, %v2092
      %2219 = vst.msk [vmem:[%s177 + $0x48] sm:$0xff] %vm1846, %v2097
      %2220 = vst.msk [vmem:[%s177 + $0x50] sm:$0xff] %vm1846, %v2102
      %2221 = vst.msk [vmem:[%s177 + $0x58] sm:$0xff] %vm1846, %v2107
      %2222 = vst.msk [vmem:[%s177 + $0x60] sm:$0xff] %vm1846, %v2112
      %2223 = vst.msk [vmem:[%s177 + $0x68] sm:$0xff] %vm1846, %v2117
      %2224 = vst.msk [vmem:[%s177 + $0x70] sm:$0xff] %vm1846, %v2122
      %2225 = vst.msk [vmem:[%s177 + $0x78] sm:$0xff] %vm1846, %v2127
      %2226 = vst.msk [vmem:[%s177 + $0x80] sm:$0xff] %vm1846, %v2132
      %2227 = vst.msk [vmem:[%s177 + $0x88] sm:$0xff] %vm1846, %v2137
      %2228 = vst.msk [vmem:[%s177 + $0x90] sm:$0xff] %vm1846, %v2142
      %2229 = vst.msk [vmem:[%s177 + $0x98] sm:$0xff] %vm1846, %v2147
      %2230 = vst.msk [vmem:[%s177 + $0xa0] sm:$0xff] %vm1846, %v2152
      %2231 = vst.msk [vmem:[%s177 + $0xa8] sm:$0xff] %vm1846, %v2157
      %2232 = vst.msk [vmem:[%s177 + $0xb0] sm:$0xff] %vm1846, %v2162
      %2233 = vst.msk [vmem:[%s177 + $0xb8] sm:$0xff] %vm1846, %v2167
      %2234 = vst.msk [vmem:[%s177 + $0xc0] sm:$0xff] %vm1846, %v2172
      %2235 = vst.msk [vmem:[%s177 + $0xc8] sm:$0xff] %vm1846, %v2177
      %2236 = vst.msk [vmem:[%s177 + $0xd0] sm:$0xff] %vm1846, %v2182
      %2237 = vst.msk [vmem:[%s177 + $0xd8] sm:$0xff] %vm1846, %v2187
      %2238 = vst.msk [vmem:[%s177 + $0xe0] sm:$0xff] %vm1846, %v2192
      %2239 = vst.msk [vmem:[%s177 + $0xe8] sm:$0xff] %vm1846, %v2197
      %2240 = vst.msk [vmem:[%s177 + $0xf0] sm:$0xff] %vm1846, %v2202
      %2241 = vst.msk [vmem:[%s177 + $0xf8] sm:$0xff] %vm1846, %v2207
      %v2242 = vsel %vm1846, %v2052, 0.0
      %v2243 = vsel %vm1846, %v2057, 0.0
      %v2244 = vadd.f32 %v2242, %v2243
      %v2245 = vsel %vm1846, %v2062, 0.0
      %v2246 = vadd.f32 %v2244, %v2245
      %v2247 = vsel %vm1846, %v2067, 0.0
      %v2248 = vadd.f32 %v2246, %v2247
      %v2249 = vsel %vm1846, %v2072, 0.0
      %v2250 = vadd.f32 %v2248, %v2249
      %v2251 = vsel %vm1846, %v2077, 0.0
      %v2252 = vadd.f32 %v2250, %v2251
      %v2253 = vsel %vm1846, %v2082, 0.0
      %v2254 = vadd.f32 %v2252, %v2253
      %v2255 = vsel %vm1846, %v2087, 0.0
      %v2256 = vadd.f32 %v2254, %v2255
      %v2257 = vsel %vm1846, %v2092, 0.0
      %v2258 = vadd.f32 %v2256, %v2257
      %v2259 = vsel %vm1846, %v2097, 0.0
      %v2260 = vadd.f32 %v2258, %v2259
      %v2261 = vsel %vm1846, %v2102, 0.0
      %v2262 = vadd.f32 %v2260, %v2261
      %v2263 = vsel %vm1846, %v2107, 0.0
      %v2264 = vadd.f32 %v2262, %v2263
      %v2265 = vsel %vm1846, %v2112, 0.0
      %v2266 = vadd.f32 %v2264, %v2265
      %v2267 = vsel %vm1846, %v2117, 0.0
      %v2268 = vadd.f32 %v2266, %v2267
      %v2269 = vsel %vm1846, %v2122, 0.0
      %v2270 = vadd.f32 %v2268, %v2269
      %v2271 = vsel %vm1846, %v2127, 0.0
      %v2272 = vadd.f32 %v2270, %v2271
      %v2273 = vsel %vm1846, %v2132, 0.0
      %v2274 = vadd.f32 %v2272, %v2273
      %v2275 = vsel %vm1846, %v2137, 0.0
      %v2276 = vadd.f32 %v2274, %v2275
      %v2277 = vsel %vm1846, %v2142, 0.0
      %v2278 = vadd.f32 %v2276, %v2277
      %v2279 = vsel %vm1846, %v2147, 0.0
      %v2280 = vadd.f32 %v2278, %v2279
      %v2281 = vsel %vm1846, %v2152, 0.0
      %v2282 = vadd.f32 %v2280, %v2281
      %v2283 = vsel %vm1846, %v2157, 0.0
      %v2284 = vadd.f32 %v2282, %v2283
      %v2285 = vsel %vm1846, %v2162, 0.0
      %v2286 = vadd.f32 %v2284, %v2285
      %v2287 = vsel %vm1846, %v2167, 0.0
      %v2288 = vadd.f32 %v2286, %v2287
      %v2289 = vsel %vm1846, %v2172, 0.0
      %v2290 = vadd.f32 %v2288, %v2289
      %v2291 = vsel %vm1846, %v2177, 0.0
      %v2292 = vadd.f32 %v2290, %v2291
      %v2293 = vsel %vm1846, %v2182, 0.0
      %v2294 = vadd.f32 %v2292, %v2293
      %v2295 = vsel %vm1846, %v2187, 0.0
      %v2296 = vadd.f32 %v2294, %v2295
      %v2297 = vsel %vm1846, %v2192, 0.0
      %v2298 = vadd.f32 %v2296, %v2297
      %v2299 = vsel %vm1846, %v2197, 0.0
      %v2300 = vadd.f32 %v2298, %v2299
      %v2301 = vsel %vm1846, %v2202, 0.0
      %v2302 = vadd.f32 %v2300, %v2301
      %v2303 = vsel %vm1846, %v2207, 0.0
      %v2304 = vadd.f32 %v2302, %v2303
      %v2305 = vrot.slane %v2304, 4
      %v2306 = vadd.f32 %v2304, %v2305
      %v2307 = vrot.slane %v2306, 2
      %v2308 = vadd.f32 %v2306, %v2307
      %v2309 = vrot.slane %v2308, 1
      %v2310 = vadd.f32 %v2308, %v2309
      %v2311 = vmul.f32 %v2052, %v2052
      %v2312 = vmul.f32 %v2057, %v2057
      %v2313 = vmul.f32 %v2062, %v2062
      %v2314 = vmul.f32 %v2067, %v2067
      %v2315 = vmul.f32 %v2072, %v2072
      %v2316 = vmul.f32 %v2077, %v2077
      %v2317 = vmul.f32 %v2082, %v2082
      %v2318 = vmul.f32 %v2087, %v2087
      %v2319 = vmul.f32 %v2092, %v2092
      %v2320 = vmul.f32 %v2097, %v2097
      %v2321 = vmul.f32 %v2102, %v2102
      %v2322 = vmul.f32 %v2107, %v2107
      %v2323 = vmul.f32 %v2112, %v2112
      %v2324 = vmul.f32 %v2117, %v2117
      %v2325 = vmul.f32 %v2122, %v2122
      %v2326 = vmul.f32 %v2127, %v2127
      %v2327 = vmul.f32 %v2132, %v2132
      %v2328 = vmul.f32 %v2137, %v2137
      %v2329 = vmul.f32 %v2142, %v2142
      %v2330 = vmul.f32 %v2147, %v2147
      %v2331 = vmul.f32 %v2152, %v2152
      %v2332 = vmul.f32 %v2157, %v2157
      %v2333 = vmul.f32 %v2162, %v2162
      %v2334 = vmul.f32 %v2167, %v2167
      %v2335 = vmul.f32 %v2172, %v2172
      %v2336 = vmul.f32 %v2177, %v2177
      %v2337 = vmul.f32 %v2182, %v2182
      %v2338 = vmul.f32 %v2187, %v2187
      %v2339 = vmul.f32 %v2192, %v2192
      %v2340 = vmul.f32 %v2197, %v2197
      %v2341 = vmul.f32 %v2202, %v2202
      %v2342 = vmul.f32 %v2207, %v2207
      %v2343 = vsel %vm1846, %v2311, 0.0
      %v2344 = vsel %vm1846, %v2312, 0.0
      %v2345 = vadd.f32 %v2343, %v2344
      %v2346 = vsel %vm1846, %v2313, 0.0
      %v2347 = vadd.f32 %v2345, %v2346
      %v2348 = vsel %vm1846, %v2314, 0.0
      %v2349 = vadd.f32 %v2347, %v2348
      %v2350 = vsel %vm1846, %v2315, 0.0
      %v2351 = vadd.f32 %v2349, %v2350
      %v2352 = vsel %vm1846, %v2316, 0.0
      %v2353 = vadd.f32 %v2351, %v2352
      %v2354 = vsel %vm1846, %v2317, 0.0
      %v2355 = vadd.f32 %v2353, %v2354
      %v2356 = vsel %vm1846, %v2318, 0.0
      %v2357 = vadd.f32 %v2355, %v2356
      %v2358 = vsel %vm1846, %v2319, 0.0
      %v2359 = vadd.f32 %v2357, %v2358
      %v2360 = vsel %vm1846, %v2320, 0.0
      %v2361 = vadd.f32 %v2359, %v2360
      %v2362 = vsel %vm1846, %v2321, 0.0
      %v2363 = vadd.f32 %v2361, %v2362
      %v2364 = vsel %vm1846, %v2322, 0.0
      %v2365 = vadd.f32 %v2363, %v2364
      %v2366 = vsel %vm1846, %v2323, 0.0
      %v2367 = vadd.f32 %v2365, %v2366
      %v2368 = vsel %vm1846, %v2324, 0.0
      %v2369 = vadd.f32 %v2367, %v2368
      %v2370 = vsel %vm1846, %v2325, 0.0
      %v2371 = vadd.f32 %v2369, %v2370
      %v2372 = vsel %vm1846, %v2326, 0.0
      %v2373 = vadd.f32 %v2371, %v2372
      %v2374 = vsel %vm1846, %v2327, 0.0
      %v2375 = vadd.f32 %v2373, %v2374
      %v2376 = vsel %vm1846, %v2328, 0.0
      %v2377 = vadd.f32 %v2375, %v2376
      %v2378 = vsel %vm1846, %v2329, 0.0
      %v2379 = vadd.f32 %v2377, %v2378
      %v2380 = vsel %vm1846, %v2330, 0.0
      %v2381 = vadd.f32 %v2379, %v2380
      %v2382 = vsel %vm1846, %v2331, 0.0
      %v2383 = vadd.f32 %v2381, %v2382
      %v2384 = vsel %vm1846, %v2332, 0.0
      %v2385 = vadd.f32 %v2383, %v2384
      %v2386 = vsel %vm1846, %v2333, 0.0
      %v2387 = vadd.f32 %v2385, %v2386
      %v2388 = vsel %vm1846, %v2334, 0.0
      %v2389 = vadd.f32 %v2387, %v2388
      %v2390 = vsel %vm1846, %v2335, 0.0
      %v2391 = vadd.f32 %v2389, %v2390
      %v2392 = vsel %vm1846, %v2336, 0.0
      %v2393 = vadd.f32 %v2391, %v2392
      %v2394 = vsel %vm1846, %v2337, 0.0
      %v2395 = vadd.f32 %v2393, %v2394
      %v2396 = vsel %vm1846, %v2338, 0.0
      %v2397 = vadd.f32 %v2395, %v2396
      %v2398 = vsel %vm1846, %v2339, 0.0
      %v2399 = vadd.f32 %v2397, %v2398
      %v2400 = vsel %vm1846, %v2340, 0.0
      %v2401 = vadd.f32 %v2399, %v2400
      %v2402 = vsel %vm1846, %v2341, 0.0
      %v2403 = vadd.f32 %v2401, %v2402
      %v2404 = vsel %vm1846, %v2342, 0.0
      %v2405 = vadd.f32 %v2403, %v2404
      %v2406 = vrot.slane %v2405, 4
      %v2407 = vadd.f32 %v2405, %v2406
      %v2408 = vrot.slane %v2407, 2
      %v2409 = vadd.f32 %v2407, %v2408
      %v2410 = vrot.slane %v2409, 1
      %v2411 = vadd.f32 %v2409, %v2410
      %vm2412 = vcmask 1040384
      %v2413 = vsel %vm2412, %v2310, %v2411
      %vm2414 = vcmask 254976
      %2415 = vst.msk [vmem:[%s181] sm:$0x3] %vm2414, %v2413
      %p2416 = scmp.lt.s32.totalorder %s15, 1
      %s2417 = scalar_select %p2416, %s15, 1
      %s2418 = smul.addr %s2417, 32
      %s2419 = smul.addr %s2418, 8
      %s2420 = scalar_lea.vmem %s2, %s2419
      %p2421 = scmp.lt.s32.totalorder %s15, 1
      %s2422 = scalar_select %p2421, %s15, 1
      %s2423 = smul.addr %s2422, 2
      %s2424 = scalar_lea.vmem %s3, %s2423
      // Predicated region
      $region29: #{_lambda_.2} parent=27 // pred_check
        %p2425 = pneg %p80
      $region30: #{_lambda_.2} parent=27 // pred_check_branch
        %2427 = sbr.rel (%p2425) target = $region32
      $region31: #{_lambda_.2} parent=27 // pred_region
        _
      $region32: #{_lambda_.2} parent=27 // pred_fallthru
        _
      // Predicated region
      $region33: #{_lambda_.2} parent=27 // pred_check
        %p2428 = pneg %p106
      $region34: #{_lambda_.2} parent=27 // pred_check_branch
        %2430 = sbr.rel (%p2428) target = $region36
      $region35: #{_lambda_.2} parent=27 // pred_region
        _
      $region36: #{_lambda_.2} parent=27 // pred_fallthru
        _
    $region28: #{_lambda_.2} parent=5 // pred_fallthru
      _
    %p2431 = scmp.le.s32.totalorder 2, %s10
    // Predicated region
    $region37: #{_lambda_.2} parent=5 // pred_check
      %p2432 = pneg %p2431
    $region38: #{_lambda_.2} parent=5 // pred_check_branch
      %2434 = sbr.rel (%p2432) target = $region40
    $region39: #{_lambda_.2} parent=5 // pred_region
      %s2435 = ssub.s32 %s10, 2
      // Predicated region
      $region41: #{_lambda_.2} parent=39 // pred_check
        %p2436 = pneg %p86
      $region42: #{_lambda_.2} parent=39 // pred_check_branch
        %2438 = sbr.rel (%p2436) target = $region44
      $region43: #{_lambda_.2} parent=39 // pred_region
        %p2439 = scmp.lt.s32.totalorder %s16, 1
        %s2440 = scalar_select %p2439, %s16, 1
        %s2441 = smul.addr %s2440, 32
        %s2442 = smul.addr %s2441, 8
        %s2443 = scalar_lea.vmem %s2, %s2442
      $region44: #{_lambda_.2} parent=39 // pred_fallthru
        _
      // Predicated region
      $region45: #{_lambda_.2} parent=39 // pred_check
        %p2444 = pneg %p112
      $region46: #{_lambda_.2} parent=39 // pred_check_branch
        %2446 = sbr.rel (%p2444) target = $region48
      $region47: #{_lambda_.2} parent=39 // pred_region
        %p2447 = scmp.lt.s32.totalorder %s16, 1
        %s2448 = scalar_select %p2447, %s16, 1
        %s2449 = smul.addr %s2448, 2
        %s2450 = scalar_lea.vmem %s3, %s2449
      $region48: #{_lambda_.2} parent=39 // pred_fallthru
        _
    $region40: #{_lambda_.2} parent=5 // pred_fallthru
      _
  $region6: #{_lambda_.2} parent=0 // loop_footer
    %s14 = sadd.s32 1, %s10
  $region7: #{_lambda_.2} parent=0 // loop_footer_branch
    %9 = sbr.rel target = $region3
  $region8: #{_lambda_.2} parent=0 // loop_exit
    _

</llo_original>
